<compile_context>
chip_gen: v6e
topology: v6e:2x2x1
jax: 0.10.0
libtpu: 0.0.40
codegen_flags: <defaults>
</compile_context>

<pallas_src>
import jax
import jax.numpy as jnp
from jax.experimental import pallas as pl
from jax.experimental.pallas import tpu as pltpu


# ----------------------------------------------------------------------------
# Host-side helpers (small structured matrices precomputed outside the kernel)
# ----------------------------------------------------------------------------
def _interp_matrix(out_size, in_size):
    """align_corners=True bilinear interpolation matrix (out_size, in_size)."""
    i = jnp.arange(out_size, dtype=jnp.float32)
    denom = max(out_size - 1, 1)
    src = i * (in_size - 1) / denom
    i0 = jnp.clip(jnp.floor(src).astype(jnp.int32), 0, in_size - 1)
    i1 = jnp.clip(i0 + 1, 0, in_size - 1)
    frac = src - i0.astype(jnp.float32)
    m = jnp.zeros((out_size, in_size), jnp.float32)
    rows = jnp.arange(out_size)
    m = m.at[rows, i0].add(1.0 - frac)
    m = m.at[rows, i1].add(frac)
    return m


def _band_weight_matrices(w_hwio, w_in, w_out, pad_left=0, scale=None):
    """Fold a (3, 3, Ci, Co) conv filter (optionally pre-scaled per output
    channel by `scale`, i.e. folded BatchNorm) into 3 banded matrices M[dy] of
    shape (w_in*Ci, w_out*Co) such that, with activations stored in the fused
    channels-last layout (H, W*C),
        conv(x)[h, :] = sum_dy x[h + dy - 1, :] @ M[dy]          (rows OOB = 0)
    Width zero-padding (conv pad=1) plus an extra `pad_left` columns of zero
    padding on the input (the F.pad offset) are built into the band structure,
    so the kernel never has to materialize width-padded activations.
    """
    kh, kw, ci, co = w_hwio.shape
    w_eff = w_hwio if scale is None else w_hwio * scale[None, None, None, :]
    wout_idx = jnp.arange(w_out)
    mats = []
    for dy in range(kh):
        m = jnp.zeros((w_in * ci, w_out * co), jnp.float32)
        for dx in range(kw):
            win_idx = wout_idx + dx - 1 - pad_left          # input column read
            valid = ((win_idx >= 0) & (win_idx < w_in)).astype(jnp.float32)
            sel = jnp.zeros((w_in, w_out), jnp.float32)
            sel = sel.at[jnp.clip(win_idx, 0, w_in - 1), wout_idx].add(valid)
            m = m + jnp.kron(sel, w_eff[dy, dx])
        mats.append(m)
    return jnp.stack(mats)                                   # (3, w_in*ci, w_out*co)


# ----------------------------------------------------------------------------
# Fused kernel: upsample + pad + concat + (conv3x3 -> BN -> ReLU) x 2
# ----------------------------------------------------------------------------
def _make_up_kernel(H2, Ho, row_off):
    def kernel(x1_ref, x2_ref, ah_ref, awc_ref, m1a_ref, m1b_ref, m2_ref,
               b1_ref, b2_ref, o_ref, x2p, x1p, z1p):
        # ---- bilinear 2x upsample of x1 in fused (H, W*C1) layout: 2 matmuls ----
        th = jnp.dot(ah_ref[...], x1_ref[0], preferred_element_type=jnp.float32)
        up = jnp.dot(th, awc_ref[...], preferred_element_type=jnp.float32)

        # ---- height-halo-padded conv1 inputs in VMEM (lane-aligned writes) ----
        # (F.pad offsets / width padding / channel concat are folded into the
        #  banded weight matrices, so nothing else is materialized.)
        x2p[...] = jnp.zeros_like(x2p)
        x1p[...] = jnp.zeros_like(x1p)
        x2p[1:1 + H2, :] = x2_ref[0]
        x1p[row_off:row_off + Ho, :] = up

        # ---- conv1 (x2 branch + upsampled-x1 branch) + BN + ReLU: 6 matmuls ----
        acc1 = jnp.dot(x2p[0:H2, :], m1a_ref[0], preferred_element_type=jnp.float32)
        acc1 = acc1 + jnp.dot(x1p[0:H2, :], m1b_ref[0], preferred_element_type=jnp.float32)
        for dy in (1, 2):
            acc1 = acc1 + jnp.dot(x2p[dy:dy + H2, :], m1a_ref[dy],
                                  preferred_element_type=jnp.float32)
            acc1 = acc1 + jnp.dot(x1p[dy:dy + H2, :], m1b_ref[dy],
                                  preferred_element_type=jnp.float32)
        z1 = jnp.maximum(acc1 + b1_ref[...], 0.0)     # BN scale folded into m1a/m1b

        # ---- conv2 + BN + ReLU: 3 matmuls ----
        z1p[...] = jnp.zeros_like(z1p)
        z1p[1:1 + H2, :] = z1
        acc2 = jnp.dot(z1p[0:H2, :], m2_ref[0], preferred_element_type=jnp.float32)
        for dy in (1, 2):
            acc2 = acc2 + jnp.dot(z1p[dy:dy + H2, :], m2_ref[dy],
                                  preferred_element_type=jnp.float32)
        o_ref[0] = jnp.maximum(acc2 + b2_ref[...], 0.0)

    return kernel


# ----------------------------------------------------------------------------
# Up module (parameters built deterministically in-script)
# ----------------------------------------------------------------------------
class UpPallas:
    """Up(in_channels, out_channels, bilinear=True) with eval-mode BatchNorm."""
    # TODO(synk): BatchNorm is implemented in eval mode (running stats folded
    # into per-channel scale/bias); train-mode batch statistics not reproduced.

    def __init__(self, in_channels, out_channels, key, eps=1e-5):
        self.in_channels = in_channels
        self.out_channels = out_channels
        self.mid = in_channels // 2
        mid = self.mid
        ks = jax.random.split(key, 10)

        def bn_params(kg, kb, km, kv, c):
            gamma = 1.0 + 0.1 * jax.random.normal(kg, (c,), jnp.float32)
            beta = 0.1 * jax.random.normal(kb, (c,), jnp.float32)
            mean = 0.1 * jax.random.normal(km, (c,), jnp.float32)
            var = jax.random.uniform(kv, (c,), jnp.float32, 0.5, 1.5)
            scale = gamma / jnp.sqrt(var + eps)
            bias = beta - mean * scale
            return scale, bias

        # conv1: in_channels -> mid
        self.w1_oihw = 0.1 * jax.random.normal(ks[0], (mid, in_channels, 3, 3), jnp.float32)
        self.w1_hwio = jnp.transpose(self.w1_oihw, (2, 3, 1, 0))
        self.scale1, self.bias1 = bn_params(ks[1], ks[2], ks[3], ks[4], mid)

        # conv2: mid -> out_channels
        self.w2_oihw = 0.1 * jax.random.normal(ks[5], (out_channels, mid, 3, 3), jnp.float32)
        self.w2_hwio = jnp.transpose(self.w2_oihw, (2, 3, 1, 0))
        self.scale2, self.bias2 = bn_params(ks[6], ks[7], ks[8], ks[9], out_channels)

    # -------- Pallas forward (single fused kernel) --------
    def __call__(self, x1, x2):
        N, C1, H1, W1 = x1.shape
        _, C2, H2, W2 = x2.shape
        mid, cout = self.mid, self.out_channels
        Ho, Wo = 2 * H1, 2 * W1
        diffY, diffX = H2 - Ho, W2 - Wo          # standard UNet: >= 0
        row_off = 1 + diffY // 2                 # conv halo (1) + F.pad top rows
        pad_left = diffX // 2                    # F.pad left columns (folded in M1b)

        # fused channels-last views of the NCHW inputs (one cheap transpose each)
        x1f = jnp.transpose(x1, (0, 2, 3, 1)).reshape(N, H1, W1 * C1)
        x2f = jnp.transpose(x2, (0, 2, 3, 1)).reshape(N, H2, W2 * C2)

        # precomputed structured matrices (tiny; weights + interpolation + BN)
        ah = _interp_matrix(Ho, H1)                                               # (Ho, H1)
        awc = jnp.kron(_interp_matrix(Wo, W1).T, jnp.eye(C1, dtype=jnp.float32))  # (W1*C1, Wo*C1)
        m1a = _band_weight_matrices(self.w1_hwio[:, :, :C2, :], W2, W2, 0, self.scale1)
        m1b = _band_weight_matrices(self.w1_hwio[:, :, C2:, :], Wo, W2, pad_left, self.scale1)
        m2 = _band_weight_matrices(self.w2_hwio, W2, W2, 0, self.scale2)
        b1 = jnp.tile(self.bias1, W2).reshape(1, W2 * mid)
        b2 = jnp.tile(self.bias2, W2).reshape(1, W2 * cout)

        kernel = _make_up_kernel(H2, Ho, row_off)

        out_f = pl.pallas_call(
            kernel,
            out_shape=jax.ShapeDtypeStruct((N, H2, W2 * cout), jnp.float32),
            grid=(N,),
            in_specs=[
                pl.BlockSpec((1, H1, W1 * C1), lambda n: (n, 0, 0)),
                pl.BlockSpec((1, H2, W2 * C2), lambda n: (n, 0, 0)),
                pl.BlockSpec((Ho, H1), lambda n: (0, 0)),
                pl.BlockSpec((W1 * C1, Wo * C1), lambda n: (0, 0)),
                pl.BlockSpec((3, W2 * C2, W2 * mid), lambda n: (0, 0, 0)),
                pl.BlockSpec((3, Wo * C1, W2 * mid), lambda n: (0, 0, 0)),
                pl.BlockSpec((3, W2 * mid, W2 * cout), lambda n: (0, 0, 0)),
                pl.BlockSpec((1, W2 * mid), lambda n: (0, 0)),
                pl.BlockSpec((1, W2 * cout), lambda n: (0, 0)),
            ],
            out_specs=pl.BlockSpec((1, H2, W2 * cout), lambda n: (n, 0, 0)),
            scratch_shapes=[
                pltpu.VMEM((H2 + 2, W2 * C2), jnp.float32),   # x2 with height halo
                pltpu.VMEM((H2 + 2, Wo * C1), jnp.float32),   # upsampled x1 with halo
                pltpu.VMEM((H2 + 2, W2 * mid), jnp.float32),  # conv1 output with halo
            ],
            compiler_params=pltpu.CompilerParams(dimension_semantics=("parallel",)),
        )(x1f, x2f, ah, awc, m1a, m1b, m2, b1, b2)

        # fused (H, W*Cout) -> NCHW: free reshape + one small transpose
        return jnp.transpose(out_f.reshape(N, H2, W2, cout), (0, 3, 1, 2))

    # -------- pure-JAX reference (for correctness check only) --------
    def reference(self, x1, x2):
        N, C, H, W = x1.shape
        ah = _interp_matrix(2 * H, H)
        aw = _interp_matrix(2 * W, W)
        t = jnp.einsum('oh,nchw->ncow', ah, x1, precision='highest')
        x1u = jnp.einsum('pw,ncow->ncop', aw, t, precision='highest')
        diffY = x2.shape[2] - x1u.shape[2]
        diffX = x2.shape[3] - x1u.shape[3]
        x1u = jnp.pad(x1u, ((0, 0), (0, 0),
                            (diffY // 2, diffY - diffY // 2),
                            (diffX // 2, diffX - diffX // 2)))
        x = jnp.concatenate([x2, x1u], axis=1)

        def conv_bn_relu(x, w_oihw, scale, bias):
            y = jax.lax.conv_general_dilated(
                x, w_oihw, window_strides=(1, 1), padding=((1, 1), (1, 1)),
                dimension_numbers=('NCHW', 'OIHW', 'NCHW'),
                precision=jax.lax.Precision.HIGHEST)
            y = y * scale[None, :, None, None] + bias[None, :, None, None]
            return jnp.maximum(y, 0.0)

        x = conv_bn_relu(x, self.w1_oihw, self.scale1, self.bias1)
        x = conv_bn_relu(x, self.w2_oihw, self.scale2, self.bias2)
        return x


# ----------------------------------------------------------------------------
if __name__ == "__main__":
    key = jax.random.PRNGKey(0)
    k1, k2, kp = jax.random.split(key, 3)

    N = 2
    in_channels = 8       # channels after concat (C(x1) + C(x2))
    out_channels = 4
    # x1: low-res feature map (gets upsampled 2x); x2: skip connection.
    x1 = jax.random.normal(k1, (N, in_channels // 2, 8, 8), jnp.float32)
    x2 = jax.random.normal(k2, (N, in_channels // 2, 16, 16), jnp.float32)

    up = UpPallas(in_channels, out_channels, kp)

    y = jax.block_until_ready(up(x1, x2))
    y_ref = up.reference(x1, x2)

    assert y.shape == (N, out_channels, 16, 16), y.shape
    max_err = float(jnp.max(jnp.abs(y - y_ref)))
    # all-f32 path: tight tolerance
    assert jnp.allclose(y, y_ref, atol=5e-4, rtol=5e-4), max_err

    print("KERNEL_OK")
</pallas_src>

<mosaic_0001>
module attributes {stable_mosaic.version = 11 : i64} {
  func.func @kernel(%arg0: i32, %arg1: memref<1x8x32xf32, #tpu.memory_space<vmem>>, %arg2: memref<1x16x64xf32, #tpu.memory_space<vmem>>, %arg3: memref<16x8xf32, #tpu.memory_space<vmem>>, %arg4: memref<32x64xf32, #tpu.memory_space<vmem>>, %arg5: memref<3x64x64xf32, #tpu.memory_space<vmem>>, %arg6: memref<3x64x64xf32, #tpu.memory_space<vmem>>, %arg7: memref<3x64x64xf32, #tpu.memory_space<vmem>>, %arg8: memref<1x64xf32, #tpu.memory_space<vmem>>, %arg9: memref<1x64xf32, #tpu.memory_space<vmem>>, %arg10: memref<1x16x64xf32, #tpu.memory_space<vmem>>, %arg11: memref<18x64xf32, #tpu.memory_space<vmem>>, %arg12: memref<18x64xf32, #tpu.memory_space<vmem>>, %arg13: memref<18x64xf32, #tpu.memory_space<vmem>>) attributes {dimension_semantics = [#tpu.dimension_semantics<parallel>], iteration_bounds = array<i64: 2>, scalar_prefetch = 0 : i64, scratch_operands = 3 : i64, tpu.core_type = #tpu.core_type<tc>, window_params = [{transform_indices = @transform_0, window_bounds = array<i64: 1, 8, 32>}, {transform_indices = @transform_1, window_bounds = array<i64: 1, 16, 64>}, {pipeline_mode = #tpu.pipeline_mode<synchronous>, transform_indices = @transform_2, window_bounds = array<i64: 16, 8>}, {pipeline_mode = #tpu.pipeline_mode<synchronous>, transform_indices = @transform_3, window_bounds = array<i64: 32, 64>}, {pipeline_mode = #tpu.pipeline_mode<synchronous>, transform_indices = @transform_4, window_bounds = array<i64: 3, 64, 64>}, {pipeline_mode = #tpu.pipeline_mode<synchronous>, transform_indices = @transform_5, window_bounds = array<i64: 3, 64, 64>}, {pipeline_mode = #tpu.pipeline_mode<synchronous>, transform_indices = @transform_6, window_bounds = array<i64: 3, 64, 64>}, {pipeline_mode = #tpu.pipeline_mode<synchronous>, transform_indices = @transform_7, window_bounds = array<i64: 1, 64>}, {pipeline_mode = #tpu.pipeline_mode<synchronous>, transform_indices = @transform_8, window_bounds = array<i64: 1, 64>}, {transform_indices = @transform_9, window_bounds = array<i64: 1, 16, 64>}]} {
    %c0 = arith.constant 0 : index
    %c0_0 = arith.constant 0 : index
    %0 = vector.load %arg3[%c0, %c0_0] : memref<16x8xf32, #tpu.memory_space<vmem>>, vector<16x8xf32>
    %c0_1 = arith.constant 0 : index
    %c0_2 = arith.constant 0 : index
    %c0_3 = arith.constant 0 : index
    %1 = vector.load %arg1[%c0_1, %c0_2, %c0_3] : memref<1x8x32xf32, #tpu.memory_space<vmem>>, vector<1x8x32xf32>
    %2 = vector.shape_cast %1 : vector<1x8x32xf32> to vector<8x32xf32>
    %cst = arith.constant dense<0.000000e+00> : vector<16x32xf32>
    %3 = tpu.matmul %0, %2, %cst {dimension_numbers = #tpu.dot_dimension_numbers<[1], [0], [0], [1], [0, 0, 1, 1], [], []>} : vector<16x8xf32>, vector<8x32xf32>, vector<16x32xf32> -> vector<16x32xf32>
    %c0_4 = arith.constant 0 : index
    %c0_5 = arith.constant 0 : index
    %4 = vector.load %arg4[%c0_4, %c0_5] : memref<32x64xf32, #tpu.memory_space<vmem>>, vector<32x64xf32>
    %cst_6 = arith.constant dense<0.000000e+00> : vector<16x64xf32>
    %5 = tpu.matmul %3, %4, %cst_6 {dimension_numbers = #tpu.dot_dimension_numbers<[1], [0], [0], [1], [0, 0, 1, 1], [], []>} : vector<16x32xf32>, vector<32x64xf32>, vector<16x64xf32> -> vector<16x64xf32>
    %cst_7 = arith.constant 0.000000e+00 : f32
    %6 = vector.broadcast %cst_7 : f32 to vector<18x64xf32>
    %c0_8 = arith.constant 0 : index
    %c0_9 = arith.constant 0 : index
    %7 = vector.load %arg11[%c0_8, %c0_9] : memref<18x64xf32, #tpu.memory_space<vmem>>, vector<18x64xf32>
    tpu.vector_store %arg11[%c0_8, %c0_9], %6 {strides = array<i32>} : memref<18x64xf32, #tpu.memory_space<vmem>>, vector<18x64xf32>,
    %cst_10 = arith.constant 0.000000e+00 : f32
    %8 = vector.broadcast %cst_10 : f32 to vector<18x64xf32>
    %c0_11 = arith.constant 0 : index
    %c0_12 = arith.constant 0 : index
    %9 = vector.load %arg12[%c0_11, %c0_12] : memref<18x64xf32, #tpu.memory_space<vmem>>, vector<18x64xf32>
    tpu.vector_store %arg12[%c0_11, %c0_12], %8 {strides = array<i32>} : memref<18x64xf32, #tpu.memory_space<vmem>>, vector<18x64xf32>,
    %c0_13 = arith.constant 0 : index
    %c0_14 = arith.constant 0 : index
    %c0_15 = arith.constant 0 : index
    %10 = vector.load %arg2[%c0_13, %c0_14, %c0_15] : memref<1x16x64xf32, #tpu.memory_space<vmem>>, vector<1x16x64xf32>
    %11 = vector.shape_cast %10 : vector<1x16x64xf32> to vector<16x64xf32>
    %c1 = arith.constant 1 : index
    %c0_16 = arith.constant 0 : index
    %12 = vector.load %arg11[%c1, %c0_16] : memref<18x64xf32, #tpu.memory_space<vmem>>, vector<16x64xf32>
    tpu.vector_store %arg11[%c1, %c0_16], %11 {strides = array<i32>} : memref<18x64xf32, #tpu.memory_space<vmem>>, vector<16x64xf32>,
    %c1_17 = arith.constant 1 : index
    %c0_18 = arith.constant 0 : index
    %13 = vector.load %arg12[%c1_17, %c0_18] : memref<18x64xf32, #tpu.memory_space<vmem>>, vector<16x64xf32>
    tpu.vector_store %arg12[%c1_17, %c0_18], %5 {strides = array<i32>} : memref<18x64xf32, #tpu.memory_space<vmem>>, vector<16x64xf32>,
    %c0_19 = arith.constant 0 : index
    %c0_20 = arith.constant 0 : index
    %14 = vector.load %arg11[%c0_19, %c0_20] : memref<18x64xf32, #tpu.memory_space<vmem>>, vector<16x64xf32>
    %c0_21 = arith.constant 0 : index
    %c0_22 = arith.constant 0 : index
    %c0_23 = arith.constant 0 : index
    %15 = vector.load %arg5[%c0_21, %c0_22, %c0_23] : memref<3x64x64xf32, #tpu.memory_space<vmem>>, vector<1x64x64xf32>
    %16 = vector.shape_cast %15 : vector<1x64x64xf32> to vector<64x64xf32>
    %cst_24 = arith.constant dense<0.000000e+00> : vector<16x64xf32>
    %17 = tpu.matmul %14, %16, %cst_24 {dimension_numbers = #tpu.dot_dimension_numbers<[1], [0], [0], [1], [0, 0, 1, 1], [], []>} : vector<16x64xf32>, vector<64x64xf32>, vector<16x64xf32> -> vector<16x64xf32>
    %c0_25 = arith.constant 0 : index
    %c0_26 = arith.constant 0 : index
    %18 = vector.load %arg12[%c0_25, %c0_26] : memref<18x64xf32, #tpu.memory_space<vmem>>, vector<16x64xf32>
    %c0_27 = arith.constant 0 : index
    %c0_28 = arith.constant 0 : index
    %c0_29 = arith.constant 0 : index
    %19 = vector.load %arg6[%c0_27, %c0_28, %c0_29] : memref<3x64x64xf32, #tpu.memory_space<vmem>>, vector<1x64x64xf32>
    %20 = vector.shape_cast %19 : vector<1x64x64xf32> to vector<64x64xf32>
    %cst_30 = arith.constant dense<0.000000e+00> : vector<16x64xf32>
    %21 = tpu.matmul %18, %20, %cst_30 {dimension_numbers = #tpu.dot_dimension_numbers<[1], [0], [0], [1], [0, 0, 1, 1], [], []>} : vector<16x64xf32>, vector<64x64xf32>, vector<16x64xf32> -> vector<16x64xf32>
    %22 = arith.addf %17, %21 : vector<16x64xf32>
    %c1_31 = arith.constant 1 : index
    %c0_32 = arith.constant 0 : index
    %23 = vector.load %arg11[%c1_31, %c0_32] : memref<18x64xf32, #tpu.memory_space<vmem>>, vector<16x64xf32>
    %c1_33 = arith.constant 1 : index
    %c0_34 = arith.constant 0 : index
    %c0_35 = arith.constant 0 : index
    %24 = vector.load %arg5[%c1_33, %c0_34, %c0_35] : memref<3x64x64xf32, #tpu.memory_space<vmem>>, vector<1x64x64xf32>
    %25 = vector.shape_cast %24 : vector<1x64x64xf32> to vector<64x64xf32>
    %cst_36 = arith.constant dense<0.000000e+00> : vector<16x64xf32>
    %26 = tpu.matmul %23, %25, %cst_36 {dimension_numbers = #tpu.dot_dimension_numbers<[1], [0], [0], [1], [0, 0, 1, 1], [], []>} : vector<16x64xf32>, vector<64x64xf32>, vector<16x64xf32> -> vector<16x64xf32>
    %27 = arith.addf %22, %26 : vector<16x64xf32>
    %c1_37 = arith.constant 1 : index
    %c0_38 = arith.constant 0 : index
    %28 = vector.load %arg12[%c1_37, %c0_38] : memref<18x64xf32, #tpu.memory_space<vmem>>, vector<16x64xf32>
    %c1_39 = arith.constant 1 : index
    %c0_40 = arith.constant 0 : index
    %c0_41 = arith.constant 0 : index
    %29 = vector.load %arg6[%c1_39, %c0_40, %c0_41] : memref<3x64x64xf32, #tpu.memory_space<vmem>>, vector<1x64x64xf32>
    %30 = vector.shape_cast %29 : vector<1x64x64xf32> to vector<64x64xf32>
    %cst_42 = arith.constant dense<0.000000e+00> : vector<16x64xf32>
    %31 = tpu.matmul %28, %30, %cst_42 {dimension_numbers = #tpu.dot_dimension_numbers<[1], [0], [0], [1], [0, 0, 1, 1], [], []>} : vector<16x64xf32>, vector<64x64xf32>, vector<16x64xf32> -> vector<16x64xf32>
    %32 = arith.addf %27, %31 : vector<16x64xf32>
    %c2 = arith.constant 2 : index
    %c0_43 = arith.constant 0 : index
    %33 = vector.load %arg11[%c2, %c0_43] : memref<18x64xf32, #tpu.memory_space<vmem>>, vector<16x64xf32>
    %c2_44 = arith.constant 2 : index
    %c0_45 = arith.constant 0 : index
    %c0_46 = arith.constant 0 : index
    %34 = vector.load %arg5[%c2_44, %c0_45, %c0_46] : memref<3x64x64xf32, #tpu.memory_space<vmem>>, vector<1x64x64xf32>
    %35 = vector.shape_cast %34 : vector<1x64x64xf32> to vector<64x64xf32>
    %cst_47 = arith.constant dense<0.000000e+00> : vector<16x64xf32>
    %36 = tpu.matmul %33, %35, %cst_47 {dimension_numbers = #tpu.dot_dimension_numbers<[1], [0], [0], [1], [0, 0, 1, 1], [], []>} : vector<16x64xf32>, vector<64x64xf32>, vector<16x64xf32> -> vector<16x64xf32>
    %37 = arith.addf %32, %36 : vector<16x64xf32>
    %c2_48 = arith.constant 2 : index
    %c0_49 = arith.constant 0 : index
    %38 = vector.load %arg12[%c2_48, %c0_49] : memref<18x64xf32, #tpu.memory_space<vmem>>, vector<16x64xf32>
    %c2_50 = arith.constant 2 : index
    %c0_51 = arith.constant 0 : index
    %c0_52 = arith.constant 0 : index
    %39 = vector.load %arg6[%c2_50, %c0_51, %c0_52] : memref<3x64x64xf32, #tpu.memory_space<vmem>>, vector<1x64x64xf32>
    %40 = vector.shape_cast %39 : vector<1x64x64xf32> to vector<64x64xf32>
    %cst_53 = arith.constant dense<0.000000e+00> : vector<16x64xf32>
    %41 = tpu.matmul %38, %40, %cst_53 {dimension_numbers = #tpu.dot_dimension_numbers<[1], [0], [0], [1], [0, 0, 1, 1], [], []>} : vector<16x64xf32>, vector<64x64xf32>, vector<16x64xf32> -> vector<16x64xf32>
    %42 = arith.addf %37, %41 : vector<16x64xf32>
    %c0_54 = arith.constant 0 : index
    %c0_55 = arith.constant 0 : index
    %43 = vector.load %arg8[%c0_54, %c0_55] : memref<1x64xf32, #tpu.memory_space<vmem>>, vector<1x64xf32>
    %44 = vector.broadcast %43 : vector<1x64xf32> to vector<16x64xf32>
    %45 = arith.addf %42, %44 : vector<16x64xf32>
    %cst_56 = arith.constant 0.000000e+00 : f32
    %46 = vector.broadcast %cst_56 : f32 to vector<16x64xf32>
    %47 = arith.maximumf %45, %46 : vector<16x64xf32>
    %cst_57 = arith.constant 0.000000e+00 : f32
    %48 = vector.broadcast %cst_57 : f32 to vector<18x64xf32>
    %c0_58 = arith.constant 0 : index
    %c0_59 = arith.constant 0 : index
    %49 = vector.load %arg13[%c0_58, %c0_59] : memref<18x64xf32, #tpu.memory_space<vmem>>, vector<18x64xf32>
    tpu.vector_store %arg13[%c0_58, %c0_59], %48 {strides = array<i32>} : memref<18x64xf32, #tpu.memory_space<vmem>>, vector<18x64xf32>,
    %c1_60 = arith.constant 1 : index
    %c0_61 = arith.constant 0 : index
    %50 = vector.load %arg13[%c1_60, %c0_61] : memref<18x64xf32, #tpu.memory_space<vmem>>, vector<16x64xf32>
    tpu.vector_store %arg13[%c1_60, %c0_61], %47 {strides = array<i32>} : memref<18x64xf32, #tpu.memory_space<vmem>>, vector<16x64xf32>,
    %c0_62 = arith.constant 0 : index
    %c0_63 = arith.constant 0 : index
    %51 = vector.load %arg13[%c0_62, %c0_63] : memref<18x64xf32, #tpu.memory_space<vmem>>, vector<16x64xf32>
    %c0_64 = arith.constant 0 : index
    %c0_65 = arith.constant 0 : index
    %c0_66 = arith.constant 0 : index
    %52 = vector.load %arg7[%c0_64, %c0_65, %c0_66] : memref<3x64x64xf32, #tpu.memory_space<vmem>>, vector<1x64x64xf32>
    %53 = vector.shape_cast %52 : vector<1x64x64xf32> to vector<64x64xf32>
    %cst_67 = arith.constant dense<0.000000e+00> : vector<16x64xf32>
    %54 = tpu.matmul %51, %53, %cst_67 {dimension_numbers = #tpu.dot_dimension_numbers<[1], [0], [0], [1], [0, 0, 1, 1], [], []>} : vector<16x64xf32>, vector<64x64xf32>, vector<16x64xf32> -> vector<16x64xf32>
    %c1_68 = arith.constant 1 : index
    %c0_69 = arith.constant 0 : index
    %55 = vector.load %arg13[%c1_68, %c0_69] : memref<18x64xf32, #tpu.memory_space<vmem>>, vector<16x64xf32>
    %c1_70 = arith.constant 1 : index
    %c0_71 = arith.constant 0 : index
    %c0_72 = arith.constant 0 : index
    %56 = vector.load %arg7[%c1_70, %c0_71, %c0_72] : memref<3x64x64xf32, #tpu.memory_space<vmem>>, vector<1x64x64xf32>
    %57 = vector.shape_cast %56 : vector<1x64x64xf32> to vector<64x64xf32>
    %cst_73 = arith.constant dense<0.000000e+00> : vector<16x64xf32>
    %58 = tpu.matmul %55, %57, %cst_73 {dimension_numbers = #tpu.dot_dimension_numbers<[1], [0], [0], [1], [0, 0, 1, 1], [], []>} : vector<16x64xf32>, vector<64x64xf32>, vector<16x64xf32> -> vector<16x64xf32>
    %59 = arith.addf %54, %58 : vector<16x64xf32>
    %c2_74 = arith.constant 2 : index
    %c0_75 = arith.constant 0 : index
    %60 = vector.load %arg13[%c2_74, %c0_75] : memref<18x64xf32, #tpu.memory_space<vmem>>, vector<16x64xf32>
    %c2_76 = arith.constant 2 : index
    %c0_77 = arith.constant 0 : index
    %c0_78 = arith.constant 0 : index
    %61 = vector.load %arg7[%c2_76, %c0_77, %c0_78] : memref<3x64x64xf32, #tpu.memory_space<vmem>>, vector<1x64x64xf32>
    %62 = vector.shape_cast %61 : vector<1x64x64xf32> to vector<64x64xf32>
    %cst_79 = arith.constant dense<0.000000e+00> : vector<16x64xf32>
    %63 = tpu.matmul %60, %62, %cst_79 {dimension_numbers = #tpu.dot_dimension_numbers<[1], [0], [0], [1], [0, 0, 1, 1], [], []>} : vector<16x64xf32>, vector<64x64xf32>, vector<16x64xf32> -> vector<16x64xf32>
    %64 = arith.addf %59, %63 : vector<16x64xf32>
    %c0_80 = arith.constant 0 : index
    %c0_81 = arith.constant 0 : index
    %65 = vector.load %arg9[%c0_80, %c0_81] : memref<1x64xf32, #tpu.memory_space<vmem>>, vector<1x64xf32>
    %66 = vector.broadcast %65 : vector<1x64xf32> to vector<16x64xf32>
    %67 = arith.addf %64, %66 : vector<16x64xf32>
    %cst_82 = arith.constant 0.000000e+00 : f32
    %68 = vector.broadcast %cst_82 : f32 to vector<16x64xf32>
    %69 = arith.maximumf %67, %68 : vector<16x64xf32>
    %c0_83 = arith.constant 0 : index
    %c0_84 = arith.constant 0 : index
    %c0_85 = arith.constant 0 : index
    %70 = vector.load %arg10[%c0_83, %c0_84, %c0_85] : memref<1x16x64xf32, #tpu.memory_space<vmem>>, vector<1x16x64xf32>
    %71 = vector.shape_cast %70 : vector<1x16x64xf32> to vector<16x64xf32>
    %72 = vector.shape_cast %69 : vector<16x64xf32> to vector<1x16x64xf32>
    tpu.vector_store %arg10[%c0_83, %c0_84, %c0_85], %72 {strides = array<i32>} : memref<1x16x64xf32, #tpu.memory_space<vmem>>, vector<1x16x64xf32>,
    return
  }
  func.func @transform_0(%arg0: i32) -> (i32, i32, i32) {
    %c0_i32 = arith.constant 0 : i32
    %c0_i32_0 = arith.constant 0 : i32
    %c0_i32_1 = arith.constant 0 : i32
    return %arg0, %c0_i32, %c0_i32_0 : i32, i32, i32
  }
  func.func @transform_1(%arg0: i32) -> (i32, i32, i32) {
    %c0_i32 = arith.constant 0 : i32
    %c0_i32_0 = arith.constant 0 : i32
    %c0_i32_1 = arith.constant 0 : i32
    return %arg0, %c0_i32, %c0_i32_0 : i32, i32, i32
  }
  func.func @transform_2(%arg0: i32) -> (i32, i32) {
    %c0_i32 = arith.constant 0 : i32
    %c0_i32_0 = arith.constant 0 : i32
    %c0_i32_1 = arith.constant 0 : i32
    return %c0_i32, %c0_i32_0 : i32, i32
  }
  func.func @transform_3(%arg0: i32) -> (i32, i32) {
    %c0_i32 = arith.constant 0 : i32
    %c0_i32_0 = arith.constant 0 : i32
    %c0_i32_1 = arith.constant 0 : i32
    return %c0_i32, %c0_i32_0 : i32, i32
  }
  func.func @transform_4(%arg0: i32) -> (i32, i32, i32) {
    %c0_i32 = arith.constant 0 : i32
    %c0_i32_0 = arith.constant 0 : i32
    %c0_i32_1 = arith.constant 0 : i32
    %c0_i32_2 = arith.constant 0 : i32
    return %c0_i32, %c0_i32_0, %c0_i32_1 : i32, i32, i32
  }
  func.func @transform_5(%arg0: i32) -> (i32, i32, i32) {
    %c0_i32 = arith.constant 0 : i32
    %c0_i32_0 = arith.constant 0 : i32
    %c0_i32_1 = arith.constant 0 : i32
    %c0_i32_2 = arith.constant 0 : i32
    return %c0_i32, %c0_i32_0, %c0_i32_1 : i32, i32, i32
  }
  func.func @transform_6(%arg0: i32) -> (i32, i32, i32) {
    %c0_i32 = arith.constant 0 : i32
    %c0_i32_0 = arith.constant 0 : i32
    %c0_i32_1 = arith.constant 0 : i32
    %c0_i32_2 = arith.constant 0 : i32
    return %c0_i32, %c0_i32_0, %c0_i32_1 : i32, i32, i32
  }
  func.func @transform_7(%arg0: i32) -> (i32, i32) {
    %c0_i32 = arith.constant 0 : i32
    %c0_i32_0 = arith.constant 0 : i32
    %c0_i32_1 = arith.constant 0 : i32
    return %c0_i32, %c0_i32_0 : i32, i32
  }
  func.func @transform_8(%arg0: i32) -> (i32, i32) {
    %c0_i32 = arith.constant 0 : i32
    %c0_i32_0 = arith.constant 0 : i32
    %c0_i32_1 = arith.constant 0 : i32
    return %c0_i32, %c0_i32_0 : i32, i32
  }
  func.func @transform_9(%arg0: i32) -> (i32, i32, i32) {
    %c0_i32 = arith.constant 0 : i32
    %c0_i32_0 = arith.constant 0 : i32
    %c0_i32_1 = arith.constant 0 : i32
    return %arg0, %c0_i32, %c0_i32_0 : i32, i32, i32
  }
}

</mosaic_0001>

<llo_original>
// kernel: tpu_custom_call.1
$region0: #{tpu_custom_call.1}
  #allocation0 [shape = 'u32[]', space=smem, size = 0x4, offset = 0x4, fixed_abs, tag = 'smem constant byte address 0x4 - core index']
  #allocation1 [shape = 'u32[144,128]{1,0:T(1,128)}', space=vmem, size = 0x12000, scoped, tag = 'internal scratch']
  #allocation2 [shape = 'f32[18,64]{1,0:T(8,128)}', space=vmem, size = 0x3000, scoped, tag = 'scratch operand']
  #allocation3 [shape = 'f32[18,64]{1,0:T(8,128)}', space=vmem, size = 0x3000, scoped, tag = 'scratch operand']
  #allocation4 [shape = 'f32[18,64]{1,0:T(8,128)}', space=vmem, size = 0x3000, scoped, tag = 'scratch operand']
  %s0 = inlined_call_operand.vmem [shape: f32[2,8,32], index: 0, kind: input, shape index: {}]
  %s1 = inlined_call_operand.hbm [shape: f32[2,16,64], index: 1, kind: input, shape index: {}]
  %s2 = inlined_call_operand.vmem [shape: f32[16,8], index: 2, kind: input, shape index: {}]
  %s3 = inlined_call_operand.hbm [shape: f32[32,64], index: 3, kind: input, shape index: {}]
  %s4 = inlined_call_operand.hbm [shape: f32[3,64,64], index: 4, kind: input, shape index: {}]
  %s5 = inlined_call_operand.hbm [shape: f32[3,64,64], index: 5, kind: input, shape index: {}]
  %s6 = inlined_call_operand.hbm [shape: f32[3,64,64], index: 6, kind: input, shape index: {}]
  %s7 = inlined_call_operand.vmem [shape: f32[1,64], index: 7, kind: input, shape index: {}]
  %s8 = inlined_call_operand.vmem [shape: f32[1,64], index: 8, kind: input, shape index: {}]
  %s9 = inlined_call_operand.hbm [shape: f32[2,16,64], index: 9, kind: output, shape index: {}]
  %s10 = sld [smem:[#allocation0]]
  $region89: #{tpu_custom_call.1} parent=0
    _
  %s12 = ssub.s32 1, %s10
  %s13 = scalar_select 0, %s12, %s10
  $region1: #{tpu_custom_call.1} parent=0
    #allocation5 [shape = 'u8[16384]{0}', space=vmem, size = 0x4000, scoped, tag = 'input window, operand 1']
    #allocation6 [shape = 's32[2]{0}', space=sflag, size = 0x8, scoped, tag = 'scoped memory for tpu_custom_call.1']
    #allocation7 [shape = 's32[2]{0}', space=sflag, size = 0x8, scoped, tag = 'scoped memory for tpu_custom_call.1']
    #allocation8 [shape = 'u8[16384]{0}', space=vmem, size = 0x4000, scoped, tag = 'input window, operand 3, single buffered']
    #allocation9 [shape = 's32[1]{0}', space=sflag, size = 0x4, scoped, tag = 'scoped memory for tpu_custom_call.1']
    #allocation10 [shape = 'u8[98304]{0}', space=vmem, size = 0x18000, scoped, tag = 'input window, operand 4, single buffered']
    #allocation11 [shape = 'u8[98304]{0}', space=vmem, size = 0x18000, scoped, tag = 'input window, operand 5, single buffered']
    #allocation12 [shape = 's32[1]{0}', space=sflag, size = 0x4, scoped, tag = 'scoped memory for tpu_custom_call.1']
    #allocation13 [shape = 'u8[98304]{0}', space=vmem, size = 0x18000, scoped, tag = 'input window, operand 6, single buffered']
    #allocation14 [shape = 'u8[16384]{0}', space=vmem, size = 0x4000, scoped, tag = 'output window, operand 0']
    %14 = vsyncpa [#allocation6], 0
    %s15 = scalar_lea.sflag [#allocation6], 1
    %16 = vsyncpa %s15, 0
    %17 = vsyncpa [#allocation9], 0
    %18 = vsyncpa [#allocation12], 0
    %19 = vsyncpa [#allocation7], 0
    %s20 = scalar_lea.sflag [#allocation7], 1
    %21 = vsyncpa %s20, 0
    loop: start=0, step=1, limit=4
    $region2: #{tpu_custom_call.1} parent=1 // loop_pre_header
      _
    $region3: #{tpu_custom_call.1} parent=1 // loop_header
      %s23 = sphi 0, %s27
      %p24 = scmp.ge.s32.totalorder %s23, 4
      %s33 = sphi 0, %s35
      %s36 = sphi 0, %s33
      %s37 = sphi 0, %s36
      %s53 = sphi 0, %s37
      %s59 = sphi 0, %s61
      %s62 = sphi 0, %s59
      %s63 = sphi 0, %s62
      %s79 = sphi 0, %s63
      %s83 = sphi 0, %s83
      %s85 = sphi 0, %s83
      %s86 = sphi 0, %s85
      %s100 = sphi 0, %s86
      %s104 = sphi 0, %s104
      %s106 = sphi 0, %s104
      %s107 = sphi 0, %s106
      %s121 = sphi 0, %s107
      %s125 = sphi 0, %s125
      %s127 = sphi 0, %s125
      %s128 = sphi 0, %s127
      %s142 = sphi 0, %s128
      %s146 = sphi 0, %s146
      %s148 = sphi 0, %s146
      %s149 = sphi 0, %s148
      %s163 = sphi 0, %s149
      %s167 = sphi 0, %s167
      %s169 = sphi 0, %s167
      %s170 = sphi 0, %s169
      %s184 = sphi 0, %s170
      %s188 = sphi 0, %s188
      %s190 = sphi 0, %s188
      %s191 = sphi 0, %s190
      %s205 = sphi 0, %s191
      %s209 = sphi 0, %s209
      %s211 = sphi 0, %s209
      %s212 = sphi 0, %s211
      %s226 = sphi 0, %s212
      %s232 = sphi 0, %s234
      %s235 = sphi 0, %s232
      %s236 = sphi 0, %s235
      %s252 = sphi 0, %s236
    $region4: #{tpu_custom_call.1} parent=1 // loop_header_branch
      %26 = sbr.rel (%p24) target = $region8
    $region5: #{tpu_custom_call.1} parent=1 // loop_body
      %s28 = ssub.s32 %s23, 1
      %s29 = ssub.s32 %s23, 2
      %s30 = sadd.s32 %s23, 1
      %s31 = ssub.s32 %s23, %s30
      %p32 = scmp.eq.s32.totalorder %s31, 0
      %s34 = sadd.s32 %s33, 1
      %s35 = scalar_select %p32, %s33, %s34
      %p38 = pneg %p32
      %p39 = scmp.eq.s32.totalorder %s23, 1
      %p40 = por %p38, %p39
      %p41 = scmp.ne.s32.totalorder %s33, %s36
      %p42 = scmp.eq.s32.totalorder %s23, 0
      %p43 = por %p41, %p42
      %p44 = scmp.ne.s32.totalorder %s33, %s36
      %p45 = scmp.eq.s32.totalorder %s28, 1
      %p46 = por %p44, %p45
      %p47 = scmp.ne.s32.totalorder %s36, %s37
      %p48 = scmp.eq.s32.totalorder %s28, 0
      %p49 = por %p47, %p48
      %p50 = scmp.ne.s32.totalorder %s36, %s37
      %p51 = scmp.eq.s32.totalorder %s29, 1
      %p52 = por %p50, %p51
      %p54 = scmp.ne.s32.totalorder %s37, %s53
      %p55 = scmp.eq.s32.totalorder %s29, 0
      %p56 = por %p54, %p55
      %s57 = ssub.s32 %s23, %s30
      %p58 = scmp.eq.s32.totalorder %s57, 0
      %s60 = sadd.s32 %s59, 1
      %s61 = scalar_select %p58, %s59, %s60
      %p64 = pneg %p58
      %p65 = scmp.eq.s32.totalorder %s23, 1
      %p66 = por %p64, %p65
      %p67 = scmp.ne.s32.totalorder %s59, %s62
      %p68 = scmp.eq.s32.totalorder %s23, 0
      %p69 = por %p67, %p68
      %p70 = scmp.ne.s32.totalorder %s59, %s62
      %p71 = scmp.eq.s32.totalorder %s28, 1
      %p72 = por %p70, %p71
      %p73 = scmp.ne.s32.totalorder %s62, %s63
      %p74 = scmp.eq.s32.totalorder %s28, 0
      %p75 = por %p73, %p74
      %p76 = scmp.ne.s32.totalorder %s62, %s63
      %p77 = scmp.eq.s32.totalorder %s29, 1
      %p78 = por %p76, %p77
      %p80 = scmp.ne.s32.totalorder %s63, %s79
      %p81 = scmp.eq.s32.totalorder %s29, 0
      %p82 = por %p80, %p81
      %s84 = sadd.s32 %s83, 1
      %p87 = scmp.eq.s32.totalorder %s23, 1
      %p88 = scmp.ne.s32.totalorder %s83, %s85
      %p89 = scmp.eq.s32.totalorder %s23, 0
      %p90 = por %p88, %p89
      %p91 = scmp.ne.s32.totalorder %s83, %s85
      %p92 = scmp.eq.s32.totalorder %s28, 1
      %p93 = por %p91, %p92
      %p94 = scmp.ne.s32.totalorder %s85, %s86
      %p95 = scmp.eq.s32.totalorder %s28, 0
      %p96 = por %p94, %p95
      %p97 = scmp.ne.s32.totalorder %s85, %s86
      %p98 = scmp.eq.s32.totalorder %s29, 1
      %p99 = por %p97, %p98
      %p101 = scmp.ne.s32.totalorder %s86, %s100
      %p102 = scmp.eq.s32.totalorder %s29, 0
      %p103 = por %p101, %p102
      %s105 = sadd.s32 %s104, 1
      %p108 = scmp.eq.s32.totalorder %s23, 1
      %p109 = scmp.ne.s32.totalorder %s104, %s106
      %p110 = scmp.eq.s32.totalorder %s23, 0
      %p111 = por %p109, %p110
      %p112 = scmp.ne.s32.totalorder %s104, %s106
      %p113 = scmp.eq.s32.totalorder %s28, 1
      %p114 = por %p112, %p113
      %p115 = scmp.ne.s32.totalorder %s106, %s107
      %p116 = scmp.eq.s32.totalorder %s28, 0
      %p117 = por %p115, %p116
      %p118 = scmp.ne.s32.totalorder %s106, %s107
      %p119 = scmp.eq.s32.totalorder %s29, 1
      %p120 = por %p118, %p119
      %p122 = scmp.ne.s32.totalorder %s107, %s121
      %p123 = scmp.eq.s32.totalorder %s29, 0
      %p124 = por %p122, %p123
      %s126 = sadd.s32 %s125, 1
      %p129 = scmp.eq.s32.totalorder %s23, 1
      %p130 = scmp.ne.s32.totalorder %s125, %s127
      %p131 = scmp.eq.s32.totalorder %s23, 0
      %p132 = por %p130, %p131
      %p133 = scmp.ne.s32.totalorder %s125, %s127
      %p134 = scmp.eq.s32.totalorder %s28, 1
      %p135 = por %p133, %p134
      %p136 = scmp.ne.s32.totalorder %s127, %s128
      %p137 = scmp.eq.s32.totalorder %s28, 0
      %p138 = por %p136, %p137
      %p139 = scmp.ne.s32.totalorder %s127, %s128
      %p140 = scmp.eq.s32.totalorder %s29, 1
      %p141 = por %p139, %p140
      %p143 = scmp.ne.s32.totalorder %s128, %s142
      %p144 = scmp.eq.s32.totalorder %s29, 0
      %p145 = por %p143, %p144
      %s147 = sadd.s32 %s146, 1
      %p150 = scmp.eq.s32.totalorder %s23, 1
      %p151 = scmp.ne.s32.totalorder %s146, %s148
      %p152 = scmp.eq.s32.totalorder %s23, 0
      %p153 = por %p151, %p152
      %p154 = scmp.ne.s32.totalorder %s146, %s148
      %p155 = scmp.eq.s32.totalorder %s28, 1
      %p156 = por %p154, %p155
      %p157 = scmp.ne.s32.totalorder %s148, %s149
      %p158 = scmp.eq.s32.totalorder %s28, 0
      %p159 = por %p157, %p158
      %p160 = scmp.ne.s32.totalorder %s148, %s149
      %p161 = scmp.eq.s32.totalorder %s29, 1
      %p162 = por %p160, %p161
      %p164 = scmp.ne.s32.totalorder %s149, %s163
      %p165 = scmp.eq.s32.totalorder %s29, 0
      %p166 = por %p164, %p165
      %s168 = sadd.s32 %s167, 1
      %p171 = scmp.eq.s32.totalorder %s23, 1
      %p172 = scmp.ne.s32.totalorder %s167, %s169
      %p173 = scmp.eq.s32.totalorder %s23, 0
      %p174 = por %p172, %p173
      %p175 = scmp.ne.s32.totalorder %s167, %s169
      %p176 = scmp.eq.s32.totalorder %s28, 1
      %p177 = por %p175, %p176
      %p178 = scmp.ne.s32.totalorder %s169, %s170
      %p179 = scmp.eq.s32.totalorder %s28, 0
      %p180 = por %p178, %p179
      %p181 = scmp.ne.s32.totalorder %s169, %s170
      %p182 = scmp.eq.s32.totalorder %s29, 1
      %p183 = por %p181, %p182
      %p185 = scmp.ne.s32.totalorder %s170, %s184
      %p186 = scmp.eq.s32.totalorder %s29, 0
      %p187 = por %p185, %p186
      %s189 = sadd.s32 %s188, 1
      %p192 = scmp.eq.s32.totalorder %s23, 1
      %p193 = scmp.ne.s32.totalorder %s188, %s190
      %p194 = scmp.eq.s32.totalorder %s23, 0
      %p195 = por %p193, %p194
      %p196 = scmp.ne.s32.totalorder %s188, %s190
      %p197 = scmp.eq.s32.totalorder %s28, 1
      %p198 = por %p196, %p197
      %p199 = scmp.ne.s32.totalorder %s190, %s191
      %p200 = scmp.eq.s32.totalorder %s28, 0
      %p201 = por %p199, %p200
      %p202 = scmp.ne.s32.totalorder %s190, %s191
      %p203 = scmp.eq.s32.totalorder %s29, 1
      %p204 = por %p202, %p203
      %p206 = scmp.ne.s32.totalorder %s191, %s205
      %p207 = scmp.eq.s32.totalorder %s29, 0
      %p208 = por %p206, %p207
      %s210 = sadd.s32 %s209, 1
      %p213 = scmp.eq.s32.totalorder %s23, 1
      %p214 = scmp.ne.s32.totalorder %s209, %s211
      %p215 = scmp.eq.s32.totalorder %s23, 0
      %p216 = por %p214, %p215
      %p217 = scmp.ne.s32.totalorder %s209, %s211
      %p218 = scmp.eq.s32.totalorder %s28, 1
      %p219 = por %p217, %p218
      %p220 = scmp.ne.s32.totalorder %s211, %s212
      %p221 = scmp.eq.s32.totalorder %s28, 0
      %p222 = por %p220, %p221
      %p223 = scmp.ne.s32.totalorder %s211, %s212
      %p224 = scmp.eq.s32.totalorder %s29, 1
      %p225 = por %p223, %p224
      %p227 = scmp.ne.s32.totalorder %s212, %s226
      %p228 = scmp.eq.s32.totalorder %s29, 0
      %p229 = por %p227, %p228
      %s230 = ssub.s32 %s23, %s30
      %p231 = scmp.eq.s32.totalorder %s230, 0
      %s233 = sadd.s32 %s232, 1
      %s234 = scalar_select %p231, %s232, %s233
      %p237 = pneg %p231
      %p238 = scmp.eq.s32.totalorder %s23, 1
      %p239 = por %p237, %p238
      %p240 = scmp.ne.s32.totalorder %s232, %s235
      %p241 = scmp.eq.s32.totalorder %s23, 0
      %p242 = por %p240, %p241
      %p243 = scmp.ne.s32.totalorder %s232, %s235
      %p244 = scmp.eq.s32.totalorder %s28, 1
      %p245 = por %p243, %p244
      %p246 = scmp.ne.s32.totalorder %s235, %s236
      %p247 = scmp.eq.s32.totalorder %s28, 0
      %p248 = por %p246, %p247
      %p249 = scmp.ne.s32.totalorder %s235, %s236
      %p250 = scmp.eq.s32.totalorder %s29, 1
      %p251 = por %p249, %p250
      %p253 = scmp.ne.s32.totalorder %s236, %s252
      %p254 = scmp.eq.s32.totalorder %s29, 0
      %p255 = por %p253, %p254
      %p256 = scmp.le.s32.totalorder 1, %s23
      %p257 = scmp.lt.s32.totalorder %s23, 3
      %p258 = pnand %p256, %p257
      %p259 = pneg %p258
      // Predicated region
      $region9: #{tpu_custom_call.1} parent=5 // pred_check
        _
      $region10: #{tpu_custom_call.1} parent=5 // pred_check_branch
        %261 = sbr.rel (%p258) target = $region12
      $region11: #{tpu_custom_call.1} parent=5 // pred_region
        %s262 = ssub.s32 %s23, 1
        // Predicated region
        $region13: #{tpu_custom_call.1} parent=11 // pred_check
          %p263 = pneg %p96
        $region14: #{tpu_custom_call.1} parent=11 // pred_check_branch
          %265 = sbr.rel (%p263) target = $region16
        $region15: #{tpu_custom_call.1} parent=11 // pred_region
          _
        $region16: #{tpu_custom_call.1} parent=11 // pred_fallthru
          _
        // Predicated region
        $region17: #{tpu_custom_call.1} parent=11 // pred_check
          %p266 = pneg %p117
        $region18: #{tpu_custom_call.1} parent=11 // pred_check_branch
          %268 = sbr.rel (%p266) target = $region20
        $region19: #{tpu_custom_call.1} parent=11 // pred_region
          %s270 = ssub.s32 512, 512
          %271 = vsyncadd [#allocation9], %s270
          %s272 = sshll.u32 [#allocation8], 4
          %s273 = int_to_ptr.vmem [resolvable:$true] %s272
          %278 = dma.hbm_to_vmem [thread:$0]  %s3, 512, %s273, [#allocation9], 128, 128, 8
        $region20: #{tpu_custom_call.1} parent=11 // pred_fallthru
          _
        // Predicated region
        $region21: #{tpu_custom_call.1} parent=11 // pred_check
          %p279 = pneg %p138
        $region22: #{tpu_custom_call.1} parent=11 // pred_check_branch
          %281 = sbr.rel (%p279) target = $region24
        $region23: #{tpu_custom_call.1} parent=11 // pred_region
          %s283 = ssub.s32 3072, 3072
          %284 = vsyncadd [#allocation9], %s283
          %s285 = sshll.u32 [#allocation10], 4
          %s286 = int_to_ptr.vmem [resolvable:$true] %s285
          %291 = dma.hbm_to_vmem [thread:$0]  %s4, 3072, %s286, [#allocation9], 128, 128, 8
        $region24: #{tpu_custom_call.1} parent=11 // pred_fallthru
          _
        // Predicated region
        $region25: #{tpu_custom_call.1} parent=11 // pred_check
          %p292 = pneg %p159
        $region26: #{tpu_custom_call.1} parent=11 // pred_check_branch
          %294 = sbr.rel (%p292) target = $region28
        $region27: #{tpu_custom_call.1} parent=11 // pred_region
          %s296 = ssub.s32 3072, 3072
          %297 = vsyncadd [#allocation12], %s296
          %s298 = sshll.u32 [#allocation11], 4
          %s299 = int_to_ptr.vmem [resolvable:$true] %s298
          %304 = dma.hbm_to_vmem [thread:$0]  %s5, 3072, %s299, [#allocation12], 128, 128, 8
        $region28: #{tpu_custom_call.1} parent=11 // pred_fallthru
          _
        // Predicated region
        $region29: #{tpu_custom_call.1} parent=11 // pred_check
          %p305 = pneg %p180
        $region30: #{tpu_custom_call.1} parent=11 // pred_check_branch
          %307 = sbr.rel (%p305) target = $region32
        $region31: #{tpu_custom_call.1} parent=11 // pred_region
          %s309 = ssub.s32 3072, 3072
          %310 = vsyncadd [#allocation12], %s309
          %s311 = sshll.u32 [#allocation13], 4
          %s312 = int_to_ptr.vmem [resolvable:$true] %s311
          %317 = dma.hbm_to_vmem [thread:$0]  %s6, 3072, %s312, [#allocation12], 128, 128, 8
        $region32: #{tpu_custom_call.1} parent=11 // pred_fallthru
          _
        // Predicated region
        $region33: #{tpu_custom_call.1} parent=11 // pred_check
          %p318 = pneg %p201
        $region34: #{tpu_custom_call.1} parent=11 // pred_check_branch
          %320 = sbr.rel (%p318) target = $region36
        $region35: #{tpu_custom_call.1} parent=11 // pred_region
          _
        $region36: #{tpu_custom_call.1} parent=11 // pred_fallthru
          _
        // Predicated region
        $region37: #{tpu_custom_call.1} parent=11 // pred_check
          %p321 = pneg %p222
        $region38: #{tpu_custom_call.1} parent=11 // pred_check_branch
          %323 = sbr.rel (%p321) target = $region40
        $region39: #{tpu_custom_call.1} parent=11 // pred_region
          _
        $region40: #{tpu_custom_call.1} parent=11 // pred_fallthru
          _
      $region12: #{tpu_custom_call.1} parent=5 // pred_fallthru
        _
      %p324 = scmp.lt.s32.totalorder %s23, 2
      // Predicated region
      $region41: #{tpu_custom_call.1} parent=5 // pred_check
        %p325 = pneg %p324
      $region42: #{tpu_custom_call.1} parent=5 // pred_check_branch
        %327 = sbr.rel (%p325) target = $region44
      $region43: #{tpu_custom_call.1} parent=5 // pred_region
        // Predicated region
        $region45: #{tpu_custom_call.1} parent=43 // pred_check
          %p328 = pneg %p43
        $region46: #{tpu_custom_call.1} parent=43 // pred_check_branch
          %330 = sbr.rel (%p328) target = $region48
        $region47: #{tpu_custom_call.1} parent=43 // pred_region
          %p331 = scmp.lt.s32.totalorder %s23, 1
          %s332 = scalar_select %p331, %s23, 1
          %s333 = smul.addr %s332, 8
          %s334 = scalar_lea.vmem %s0, %s333
        $region48: #{tpu_custom_call.1} parent=43 // pred_fallthru
          _
        // Predicated region
        $region49: #{tpu_custom_call.1} parent=43 // pred_check
          %p335 = pneg %p69
        $region50: #{tpu_custom_call.1} parent=43 // pred_check_branch
          %337 = sbr.rel (%p335) target = $region52
        $region51: #{tpu_custom_call.1} parent=43 // pred_region
          %s338 = sand.u32 %s59, 1
          %s339 = scalar_lea.sflag [#allocation6], %s338
          %s340 = sand.u32 %s59, 1
          %s341 = smul.addr %s340, 16
          %s342 = scalar_lea.vmem [#allocation5], %s341
          %s344 = ssub.s32 256, 256
          %345 = vsyncadd %s339, %s344
          %s346 = smul.addr %s23, 2
          %s347 = smul.addr %s346, 128
          %s348 = scalar_lea.hbm %s1, %s347
          %s349 = sshll.u32 %s342, 4
          %s350 = int_to_ptr.vmem [resolvable:$true] %s349
          %355 = dma.hbm_to_vmem [thread:$0]  %s348, 256, %s350, %s339, 128, 128, 8
        $region52: #{tpu_custom_call.1} parent=43 // pred_fallthru
          _
      $region44: #{tpu_custom_call.1} parent=5 // pred_fallthru
        _
      %p356 = scmp.le.s32.totalorder 1, %s23
      %p357 = scmp.lt.s32.totalorder %s23, 3
      %p358 = pnand %p356, %p357
      %p359 = pneg %p358
      // Predicated region
      $region53: #{tpu_custom_call.1} parent=5 // pred_check
        _
      $region54: #{tpu_custom_call.1} parent=5 // pred_check_branch
        %361 = sbr.rel (%p358) target = $region56
      $region55: #{tpu_custom_call.1} parent=5 // pred_region
        %s362 = ssub.s32 %s23, 1
        %s363 = sand.u32 %s62, 1
        %s364 = scalar_lea.sflag [#allocation6], %s363
        %s365 = sand.u32 %s62, 1
        %s366 = smul.addr %s365, 16
        %s367 = scalar_lea.vmem [#allocation5], %s366
        // Predicated region
        $region57: #{tpu_custom_call.1} parent=55 // pred_check
          %p368 = pneg %p75
        $region58: #{tpu_custom_call.1} parent=55 // pred_check_branch
          %370 = sbr.rel (%p368) target = $region60
        $region59: #{tpu_custom_call.1} parent=55 // pred_region
          %371 = dma.done %s364, 256
        $region60: #{tpu_custom_call.1} parent=55 // pred_fallthru
          _
        // Predicated region
        $region61: #{tpu_custom_call.1} parent=55 // pred_check
          %p372 = pneg %p117
        $region62: #{tpu_custom_call.1} parent=55 // pred_check_branch
          %374 = sbr.rel (%p372) target = $region64
        $region63: #{tpu_custom_call.1} parent=55 // pred_region
          %375 = dma.done [#allocation9], 512
        $region64: #{tpu_custom_call.1} parent=55 // pred_fallthru
          _
        // Predicated region
        $region65: #{tpu_custom_call.1} parent=55 // pred_check
          %p376 = pneg %p138
        $region66: #{tpu_custom_call.1} parent=55 // pred_check_branch
          %378 = sbr.rel (%p376) target = $region68
        $region67: #{tpu_custom_call.1} parent=55 // pred_region
          %379 = dma.done [#allocation9], 3072
        $region68: #{tpu_custom_call.1} parent=55 // pred_fallthru
          _
        // Predicated region
        $region69: #{tpu_custom_call.1} parent=55 // pred_check
          %p380 = pneg %p159
        $region70: #{tpu_custom_call.1} parent=55 // pred_check_branch
          %382 = sbr.rel (%p380) target = $region72
        $region71: #{tpu_custom_call.1} parent=55 // pred_region
          %383 = dma.done [#allocation12], 3072
        $region72: #{tpu_custom_call.1} parent=55 // pred_fallthru
          _
        // Predicated region
        $region73: #{tpu_custom_call.1} parent=55 // pred_check
          %p384 = pneg %p180
        $region74: #{tpu_custom_call.1} parent=55 // pred_check_branch
          %386 = sbr.rel (%p384) target = $region76
        $region75: #{tpu_custom_call.1} parent=55 // pred_region
          %387 = dma.done [#allocation12], 3072
        $region76: #{tpu_custom_call.1} parent=55 // pred_fallthru
          _
        %p388 = scmp.lt.s32.totalorder %s28, 1
        %s389 = scalar_select %p388, %s28, 1
        %s390 = smul.addr %s389, 8
        %s391 = scalar_lea.vmem %s0, %s390
        %p392 = pneg %p49
        %p393 = pneg %p46
        %s394 = sand.u32 %s62, 1
        %s395 = scalar_lea.sflag [#allocation6], %s394
        %s396 = sand.u32 %s62, 1
        %s397 = smul.addr %s396, 16
        %s398 = scalar_lea.vmem [#allocation5], %s397
        %p399 = pneg %p75
        %p400 = pneg %p72
        %p401 = pneg %p96
        %p402 = pneg %p93
        %p403 = pneg %p117
        %p404 = pneg %p114
        %p405 = pneg %p138
        %p406 = pneg %p135
        %p407 = pneg %p159
        %p408 = pneg %p156
        %p409 = pneg %p180
        %p410 = pneg %p177
        %p411 = pneg %p201
        %p412 = pneg %p198
        %p413 = pneg %p222
        %p414 = pneg %p219
        %p415 = pneg %p248
        %p416 = pneg %p245
        %s417 = sand.u32 %s235, 1
        %s418 = scalar_lea.sflag [#allocation7], %s417
        %s419 = sand.u32 %s235, 1
        %s420 = smul.addr %s419, 16
        %s421 = scalar_lea.vmem [#allocation14], %s420
        %p422 = scmp.lt.s32.totalorder %s28, 1
        %s423 = scalar_select %p422, %s28, 1
        %s424 = smul.addr %s423, 8
        %s425 = scalar_lea.vmem %s0, %s424
        %v426 = vld [vmem:[%s2] sm:$0xff]
        %v427 = vld [vmem:[%s2 + $0x8] sm:$0xff]
        %v428 = vld [vmem:[%s425] sm:$0xff]
        %vm429 = vcmask 64512
        %v431 = vsel %vm429, %v426, 0
        %v434 = vsel %vm429, %v427, 0
        %436 = vmatprep.subr.mxu0 0.0
        %437 = vmatpush1.msra.mxu0 0.0
        %438 = vmatprep.subr.mxu0 0.0
        %439 = vmatpush1.msra.mxu0 0.0
        %440 = vmatprep.subr.mxu0 0.0
        %441 = vmatpush1.msra.mxu0 0.0
        %442 = vmatprep.subr.mxu0 0.0
        %443 = vmatpush1.msra.mxu0 0.0
        %444 = vmatprep.subr.mxu0 0.0
        %445 = vmatpush1.msra.mxu0 0.0
        %446 = vmatprep.subr.mxu0 0.0
        %447 = vmatpush1.msra.mxu0 0.0
        %448 = vmatprep.subr.mxu0 0.0
        %449 = vmatpush1.msra.mxu0 0.0
        %450 = vmatprep.subr.mxu0 0.0
        %451 = vmatpush1.msra.mxu0 0.0
        %452 = vmatprep.subr.mxu0 0.0
        %453 = vmatpush1.msra.mxu0 0.0
        %454 = vmatprep.subr.mxu0 0.0
        %455 = vmatpush1.msra.mxu0 0.0
        %456 = vmatprep.subr.mxu0 0.0
        %457 = vmatpush1.msra.mxu0 0.0
        %458 = vmatprep.subr.mxu0 0.0
        %459 = vmatpush1.msra.mxu0 0.0
        %460 = vmatprep.subr.mxu0 0.0
        %461 = vmatpush1.msra.mxu0 0.0
        %462 = vmatprep.subr.mxu0 0.0
        %463 = vmatpush1.msra.mxu0 0.0
        %464 = vmatprep.subr.mxu0 0.0
        %465 = vmatpush1.msra.mxu0 0.0
        %466 = vmatprep.subr.mxu0 0.0
        %467 = vmatpush1.msra.mxu0 %v428
        %468 = vmatprep.subr.mxu0 0.0
        %469 = vmatpush2.msra.mxu0 0.0
        %470 = vmatprep.subr.mxu0 0.0
        %471 = vmatpush2.msra.mxu0 0.0
        %472 = vmatprep.subr.mxu0 0.0
        %473 = vmatpush2.msra.mxu0 0.0
        %474 = vmatprep.subr.mxu0 0.0
        %475 = vmatpush2.msra.mxu0 0.0
        %476 = vmatprep.subr.mxu0 0.0
        %477 = vmatpush2.msra.mxu0 0.0
        %478 = vmatprep.subr.mxu0 0.0
        %479 = vmatpush2.msra.mxu0 0.0
        %480 = vmatprep.subr.mxu0 0.0
        %481 = vmatpush2.msra.mxu0 0.0
        %482 = vmatprep.subr.mxu0 0.0
        %483 = vmatpush2.msra.mxu0 0.0
        %484 = vmatprep.subr.mxu0 0.0
        %485 = vmatpush2.msra.mxu0 0.0
        %486 = vmatprep.subr.mxu0 0.0
        %487 = vmatpush2.msra.mxu0 0.0
        %488 = vmatprep.subr.mxu0 0.0
        %489 = vmatpush2.msra.mxu0 0.0
        %490 = vmatprep.subr.mxu0 0.0
        %491 = vmatpush2.msra.mxu0 0.0
        %492 = vmatprep.subr.mxu0 0.0
        %493 = vmatpush2.msra.mxu0 0.0
        %494 = vmatprep.subr.mxu0 0.0
        %495 = vmatpush2.msra.mxu0 0.0
        %496 = vmatprep.subr.mxu0 0.0
        %497 = vmatpush2.msra.mxu0 0.0
        %498 = vmatprep.subr.mxu0 0.0
        %499 = vmatpush2.msra.mxu0 0.0
        %500 = vmatprep.mubr.f32.mxu0 0.0
        %501 = vmatmul.mubr.f32.gmra.mxu0 %v431
        %v502 = vpop.f32.mrf.mxu0
        %v503 = vadd.f32 0.0, %v502
        %v504 = vpop.f32.mrf.mxu0
        %505 = vmatprep.mubr.f32.mxu0 0.0
        %506 = vmatmul.mubr.f32.gmra.mxu0 %v434
        %v507 = vpop.f32.mrf.mxu0
        %v508 = vadd.f32 0.0, %v507
        %v509 = vpop.f32.mrf.mxu0
        %510 = vdwg.mxu0
        %v511 = vld [vmem:[#allocation8] sm:$0xff]
        %v512 = vld [vmem:[#allocation8 + $0x8] sm:$0xff]
        %v513 = vld [vmem:[#allocation8 + $0x10] sm:$0xff]
        %v514 = vld [vmem:[#allocation8 + $0x18] sm:$0xff]
        %vm515 = vcmask 261120
        %v517 = vsel %vm515, %v503, 0
        %v520 = vsel %vm515, %v508, 0
        %522 = vmatprep.subr.mxu0 0.0
        %523 = vmatpush1.msra.mxu0 0.0
        %524 = vmatprep.subr.mxu0 0.0
        %525 = vmatpush1.msra.mxu0 0.0
        %526 = vmatprep.subr.mxu0 0.0
        %527 = vmatpush1.msra.mxu0 0.0
        %528 = vmatprep.subr.mxu0 0.0
        %529 = vmatpush1.msra.mxu0 0.0
        %530 = vmatprep.subr.mxu0 0.0
        %531 = vmatpush1.msra.mxu0 0.0
        %532 = vmatprep.subr.mxu0 0.0
        %533 = vmatpush1.msra.mxu0 0.0
        %534 = vmatprep.subr.mxu0 0.0
        %535 = vmatpush1.msra.mxu0 0.0
        %536 = vmatprep.subr.mxu0 0.0
        %537 = vmatpush1.msra.mxu0 0.0
        %538 = vmatprep.subr.mxu0 0.0
        %539 = vmatpush1.msra.mxu0 0.0
        %540 = vmatprep.subr.mxu0 0.0
        %541 = vmatpush1.msra.mxu0 0.0
        %542 = vmatprep.subr.mxu0 0.0
        %543 = vmatpush1.msra.mxu0 0.0
        %544 = vmatprep.subr.mxu0 0.0
        %545 = vmatpush1.msra.mxu0 0.0
        %546 = vmatprep.subr.mxu0 0.0
        %547 = vmatpush1.msra.mxu0 %v514
        %548 = vmatprep.subr.mxu0 0.0
        %549 = vmatpush1.msra.mxu0 %v513
        %550 = vmatprep.subr.mxu0 0.0
        %551 = vmatpush1.msra.mxu0 %v512
        %552 = vmatprep.subr.mxu0 0.0
        %553 = vmatpush1.msra.mxu0 %v511
        %554 = vmatprep.subr.mxu0 0.0
        %555 = vmatpush2.msra.mxu0 0.0
        %556 = vmatprep.subr.mxu0 0.0
        %557 = vmatpush2.msra.mxu0 0.0
        %558 = vmatprep.subr.mxu0 0.0
        %559 = vmatpush2.msra.mxu0 0.0
        %560 = vmatprep.subr.mxu0 0.0
        %561 = vmatpush2.msra.mxu0 0.0
        %562 = vmatprep.subr.mxu0 0.0
        %563 = vmatpush2.msra.mxu0 0.0
        %564 = vmatprep.subr.mxu0 0.0
        %565 = vmatpush2.msra.mxu0 0.0
        %566 = vmatprep.subr.mxu0 0.0
        %567 = vmatpush2.msra.mxu0 0.0
        %568 = vmatprep.subr.mxu0 0.0
        %569 = vmatpush2.msra.mxu0 0.0
        %570 = vmatprep.subr.mxu0 0.0
        %571 = vmatpush2.msra.mxu0 0.0
        %572 = vmatprep.subr.mxu0 0.0
        %573 = vmatpush2.msra.mxu0 0.0
        %574 = vmatprep.subr.mxu0 0.0
        %575 = vmatpush2.msra.mxu0 0.0
        %576 = vmatprep.subr.mxu0 0.0
        %577 = vmatpush2.msra.mxu0 0.0
        %578 = vmatprep.subr.mxu0 0.0
        %579 = vmatpush2.msra.mxu0 0.0
        %580 = vmatprep.subr.mxu0 0.0
        %581 = vmatpush2.msra.mxu0 0.0
        %582 = vmatprep.subr.mxu0 0.0
        %583 = vmatpush2.msra.mxu0 0.0
        %584 = vmatprep.subr.mxu0 0.0
        %585 = vmatpush2.msra.mxu0 0.0
        %586 = vmatprep.mubr.f32.mxu0 0.0
        %587 = vmatmul.mubr.f32.gmra.mxu0 %v517
        %v588 = vpop.f32.mrf.mxu0
        %v589 = vadd.f32 0.0, %v588
        %v590 = vpop.f32.mrf.mxu0
        %591 = vmatprep.mubr.f32.mxu0 0.0
        %592 = vmatmul.mubr.f32.gmra.mxu0 %v520
        %v593 = vpop.f32.mrf.mxu0
        %v594 = vadd.f32 0.0, %v593
        %v595 = vpop.f32.mrf.mxu0
        %596 = vdwg.mxu0
        %vm597 = vcmask 523264
        %598 = vst.msk [vmem:[#allocation2] sm:$0xff] %vm597, 0.0
        %599 = vst.msk [vmem:[#allocation2 + $0x8] sm:$0xff] %vm597, 0.0
        %vm600 = vcmask 517120
        %601 = vst.msk [vmem:[#allocation2 + $0x10] sm:$0x3] %vm600, 0.0
        %602 = vst.msk [vmem:[#allocation3] sm:$0xff] %vm597, 0.0
        %603 = vst.msk [vmem:[#allocation3 + $0x8] sm:$0xff] %vm597, 0.0
        %604 = vst.msk [vmem:[#allocation3 + $0x10] sm:$0x3] %vm600, 0.0
        %v605 = vld [vmem:[%s367] sm:$0xff]
        %v606 = vld [vmem:[%s367 + $0x8] sm:$0xff]
        %607 = vst.msk [vmem:[#allocation2 + $0x1] sm:$0xff] %vm597, %v605
        %608 = vst.msk [vmem:[#allocation2 + $0x9] sm:$0xff] %vm597, %v606
        %609 = vst.msk [vmem:[#allocation3 + $0x1] sm:$0xff] %vm597, %v589
        %610 = vst.msk [vmem:[#allocation3 + $0x9] sm:$0xff] %vm597, %v594
        %v611 = vld [vmem:[#allocation2] sm:$0xff]
        %v612 = vld [vmem:[#allocation2 + $0x8] sm:$0xff]
        %v613 = vld [vmem:[#allocation10] sm:$0xff]
        %v614 = vld [vmem:[#allocation10 + $0x8] sm:$0xff]
        %v615 = vld [vmem:[#allocation10 + $0x10] sm:$0xff]
        %v616 = vld [vmem:[#allocation10 + $0x18] sm:$0xff]
        %v617 = vld [vmem:[#allocation10 + $0x20] sm:$0xff]
        %v618 = vld [vmem:[#allocation10 + $0x28] sm:$0xff]
        %v619 = vld [vmem:[#allocation10 + $0x30] sm:$0xff]
        %v620 = vld [vmem:[#allocation10 + $0x38] sm:$0xff]
        %v621 = vld [vmem:[#allocation3] sm:$0xff]
        %v622 = vld [vmem:[#allocation3 + $0x8] sm:$0xff]
        %v623 = vld [vmem:[#allocation11] sm:$0xff]
        %v624 = vld [vmem:[#allocation11 + $0x8] sm:$0xff]
        %v625 = vld [vmem:[#allocation11 + $0x10] sm:$0xff]
        %v626 = vld [vmem:[#allocation11 + $0x18] sm:$0xff]
        %v627 = vld [vmem:[#allocation11 + $0x20] sm:$0xff]
        %v628 = vld [vmem:[#allocation11 + $0x28] sm:$0xff]
        %v629 = vld [vmem:[#allocation11 + $0x30] sm:$0xff]
        %v630 = vld [vmem:[#allocation11 + $0x38] sm:$0xff]
        %v632 = vsel %vm597, %v621, 0
        %v635 = vsel %vm597, %v622, 0
        %637 = vmatprep.subr.mxu0 0.0
        %638 = vmatpush1.msra.mxu0 0.0
        %639 = vmatprep.subr.mxu0 0.0
        %640 = vmatpush1.msra.mxu0 0.0
        %641 = vmatprep.subr.mxu0 0.0
        %642 = vmatpush1.msra.mxu0 0.0
        %643 = vmatprep.subr.mxu0 0.0
        %644 = vmatpush1.msra.mxu0 0.0
        %645 = vmatprep.subr.mxu0 0.0
        %646 = vmatpush1.msra.mxu0 0.0
        %647 = vmatprep.subr.mxu0 0.0
        %648 = vmatpush1.msra.mxu0 0.0
        %649 = vmatprep.subr.mxu0 0.0
        %650 = vmatpush1.msra.mxu0 0.0
        %651 = vmatprep.subr.mxu0 0.0
        %652 = vmatpush1.msra.mxu0 0.0
        %653 = vmatprep.subr.mxu0 0.0
        %654 = vmatpush1.msra.mxu0 %v630
        %655 = vmatprep.subr.mxu0 0.0
        %656 = vmatpush1.msra.mxu0 %v629
        %657 = vmatprep.subr.mxu0 0.0
        %658 = vmatpush1.msra.mxu0 %v628
        %659 = vmatprep.subr.mxu0 0.0
        %660 = vmatpush1.msra.mxu0 %v627
        %661 = vmatprep.subr.mxu0 0.0
        %662 = vmatpush1.msra.mxu0 %v626
        %663 = vmatprep.subr.mxu0 0.0
        %664 = vmatpush1.msra.mxu0 %v625
        %665 = vmatprep.subr.mxu0 0.0
        %666 = vmatpush1.msra.mxu0 %v624
        %667 = vmatprep.subr.mxu0 0.0
        %668 = vmatpush1.msra.mxu0 %v623
        %669 = vmatprep.subr.mxu0 0.0
        %670 = vmatpush2.msra.mxu0 0.0
        %671 = vmatprep.subr.mxu0 0.0
        %672 = vmatpush2.msra.mxu0 0.0
        %673 = vmatprep.subr.mxu0 0.0
        %674 = vmatpush2.msra.mxu0 0.0
        %675 = vmatprep.subr.mxu0 0.0
        %676 = vmatpush2.msra.mxu0 0.0
        %677 = vmatprep.subr.mxu0 0.0
        %678 = vmatpush2.msra.mxu0 0.0
        %679 = vmatprep.subr.mxu0 0.0
        %680 = vmatpush2.msra.mxu0 0.0
        %681 = vmatprep.subr.mxu0 0.0
        %682 = vmatpush2.msra.mxu0 0.0
        %683 = vmatprep.subr.mxu0 0.0
        %684 = vmatpush2.msra.mxu0 0.0
        %685 = vmatprep.subr.mxu0 0.0
        %686 = vmatpush2.msra.mxu0 0.0
        %687 = vmatprep.subr.mxu0 0.0
        %688 = vmatpush2.msra.mxu0 0.0
        %689 = vmatprep.subr.mxu0 0.0
        %690 = vmatpush2.msra.mxu0 0.0
        %691 = vmatprep.subr.mxu0 0.0
        %692 = vmatpush2.msra.mxu0 0.0
        %693 = vmatprep.subr.mxu0 0.0
        %694 = vmatpush2.msra.mxu0 0.0
        %695 = vmatprep.subr.mxu0 0.0
        %696 = vmatpush2.msra.mxu0 0.0
        %697 = vmatprep.subr.mxu0 0.0
        %698 = vmatpush2.msra.mxu0 0.0
        %699 = vmatprep.subr.mxu0 0.0
        %700 = vmatpush2.msra.mxu0 0.0
        %701 = vmatprep.mubr.f32.mxu0 0.0
        %702 = vmatmul.mubr.f32.gmra.mxu0 %v632
        %v703 = vpop.f32.mrf.mxu0
        %v704 = vadd.f32 0.0, %v703
        %v705 = vpop.f32.mrf.mxu0
        %706 = vmatprep.mubr.f32.mxu0 0.0
        %707 = vmatmul.mubr.f32.gmra.mxu0 %v635
        %v708 = vpop.f32.mrf.mxu0
        %v709 = vadd.f32 0.0, %v708
        %v710 = vpop.f32.mrf.mxu0
        %711 = vdwg.mxu0
        %v713 = vsel %vm597, %v611, 0
        %v716 = vsel %vm597, %v612, 0
        %718 = vmatprep.subr.mxu0 0.0
        %719 = vmatpush1.msra.mxu0 0.0
        %720 = vmatprep.subr.mxu0 0.0
        %721 = vmatpush1.msra.mxu0 0.0
        %722 = vmatprep.subr.mxu0 0.0
        %723 = vmatpush1.msra.mxu0 0.0
        %724 = vmatprep.subr.mxu0 0.0
        %725 = vmatpush1.msra.mxu0 0.0
        %726 = vmatprep.subr.mxu0 0.0
        %727 = vmatpush1.msra.mxu0 0.0
        %728 = vmatprep.subr.mxu0 0.0
        %729 = vmatpush1.msra.mxu0 0.0
        %730 = vmatprep.subr.mxu0 0.0
        %731 = vmatpush1.msra.mxu0 0.0
        %732 = vmatprep.subr.mxu0 0.0
        %733 = vmatpush1.msra.mxu0 0.0
        %734 = vmatprep.subr.mxu0 0.0
        %735 = vmatpush1.msra.mxu0 %v620
        %736 = vmatprep.subr.mxu0 0.0
        %737 = vmatpush1.msra.mxu0 %v619
        %738 = vmatprep.subr.mxu0 0.0
        %739 = vmatpush1.msra.mxu0 %v618
        %740 = vmatprep.subr.mxu0 0.0
        %741 = vmatpush1.msra.mxu0 %v617
        %742 = vmatprep.subr.mxu0 0.0
        %743 = vmatpush1.msra.mxu0 %v616
        %744 = vmatprep.subr.mxu0 0.0
        %745 = vmatpush1.msra.mxu0 %v615
        %746 = vmatprep.subr.mxu0 0.0
        %747 = vmatpush1.msra.mxu0 %v614
        %748 = vmatprep.subr.mxu0 0.0
        %749 = vmatpush1.msra.mxu0 %v613
        %750 = vmatprep.subr.mxu0 0.0
        %751 = vmatpush2.msra.mxu0 0.0
        %752 = vmatprep.subr.mxu0 0.0
        %753 = vmatpush2.msra.mxu0 0.0
        %754 = vmatprep.subr.mxu0 0.0
        %755 = vmatpush2.msra.mxu0 0.0
        %756 = vmatprep.subr.mxu0 0.0
        %757 = vmatpush2.msra.mxu0 0.0
        %758 = vmatprep.subr.mxu0 0.0
        %759 = vmatpush2.msra.mxu0 0.0
        %760 = vmatprep.subr.mxu0 0.0
        %761 = vmatpush2.msra.mxu0 0.0
        %762 = vmatprep.subr.mxu0 0.0
        %763 = vmatpush2.msra.mxu0 0.0
        %764 = vmatprep.subr.mxu0 0.0
        %765 = vmatpush2.msra.mxu0 0.0
        %766 = vmatprep.subr.mxu0 0.0
        %767 = vmatpush2.msra.mxu0 0.0
        %768 = vmatprep.subr.mxu0 0.0
        %769 = vmatpush2.msra.mxu0 0.0
        %770 = vmatprep.subr.mxu0 0.0
        %771 = vmatpush2.msra.mxu0 0.0
        %772 = vmatprep.subr.mxu0 0.0
        %773 = vmatpush2.msra.mxu0 0.0
        %774 = vmatprep.subr.mxu0 0.0
        %775 = vmatpush2.msra.mxu0 0.0
        %776 = vmatprep.subr.mxu0 0.0
        %777 = vmatpush2.msra.mxu0 0.0
        %778 = vmatprep.subr.mxu0 0.0
        %779 = vmatpush2.msra.mxu0 0.0
        %780 = vmatprep.subr.mxu0 0.0
        %781 = vmatpush2.msra.mxu0 0.0
        %782 = vmatprep.mubr.f32.mxu0 0.0
        %783 = vmatmul.mubr.f32.gmra.mxu0 %v713
        %v784 = vpop.f32.mrf.mxu0
        %v785 = vadd.f32 %v704, %v784
        %v786 = vpop.f32.mrf.mxu0
        %787 = vmatprep.mubr.f32.mxu0 0.0
        %788 = vmatmul.mubr.f32.gmra.mxu0 %v716
        %v789 = vpop.f32.mrf.mxu0
        %v790 = vadd.f32 %v709, %v789
        %v791 = vpop.f32.mrf.mxu0
        %792 = vdwg.mxu0
        %v793 = vld [vmem:[#allocation2 + $0x1] sm:$0xff]
        %v794 = vld [vmem:[#allocation2 + $0x9] sm:$0xff]
        %s795 = scalar_lea.vmem [#allocation10], 64
        %v796 = vld [vmem:[%s795] sm:$0xff]
        %v797 = vld [vmem:[%s795 + $0x8] sm:$0xff]
        %v798 = vld [vmem:[%s795 + $0x10] sm:$0xff]
        %v799 = vld [vmem:[%s795 + $0x18] sm:$0xff]
        %v800 = vld [vmem:[%s795 + $0x20] sm:$0xff]
        %v801 = vld [vmem:[%s795 + $0x28] sm:$0xff]
        %v802 = vld [vmem:[%s795 + $0x30] sm:$0xff]
        %v803 = vld [vmem:[%s795 + $0x38] sm:$0xff]
        %v805 = vsel %vm597, %v793, 0
        %v808 = vsel %vm597, %v794, 0
        %810 = vmatprep.subr.mxu0 0.0
        %811 = vmatpush1.msra.mxu0 0.0
        %812 = vmatprep.subr.mxu0 0.0
        %813 = vmatpush1.msra.mxu0 0.0
        %814 = vmatprep.subr.mxu0 0.0
        %815 = vmatpush1.msra.mxu0 0.0
        %816 = vmatprep.subr.mxu0 0.0
        %817 = vmatpush1.msra.mxu0 0.0
        %818 = vmatprep.subr.mxu0 0.0
        %819 = vmatpush1.msra.mxu0 0.0
        %820 = vmatprep.subr.mxu0 0.0
        %821 = vmatpush1.msra.mxu0 0.0
        %822 = vmatprep.subr.mxu0 0.0
        %823 = vmatpush1.msra.mxu0 0.0
        %824 = vmatprep.subr.mxu0 0.0
        %825 = vmatpush1.msra.mxu0 0.0
        %826 = vmatprep.subr.mxu0 0.0
        %827 = vmatpush1.msra.mxu0 %v803
        %828 = vmatprep.subr.mxu0 0.0
        %829 = vmatpush1.msra.mxu0 %v802
        %830 = vmatprep.subr.mxu0 0.0
        %831 = vmatpush1.msra.mxu0 %v801
        %832 = vmatprep.subr.mxu0 0.0
        %833 = vmatpush1.msra.mxu0 %v800
        %834 = vmatprep.subr.mxu0 0.0
        %835 = vmatpush1.msra.mxu0 %v799
        %836 = vmatprep.subr.mxu0 0.0
        %837 = vmatpush1.msra.mxu0 %v798
        %838 = vmatprep.subr.mxu0 0.0
        %839 = vmatpush1.msra.mxu0 %v797
        %840 = vmatprep.subr.mxu0 0.0
        %841 = vmatpush1.msra.mxu0 %v796
        %842 = vmatprep.subr.mxu0 0.0
        %843 = vmatpush2.msra.mxu0 0.0
        %844 = vmatprep.subr.mxu0 0.0
        %845 = vmatpush2.msra.mxu0 0.0
        %846 = vmatprep.subr.mxu0 0.0
        %847 = vmatpush2.msra.mxu0 0.0
        %848 = vmatprep.subr.mxu0 0.0
        %849 = vmatpush2.msra.mxu0 0.0
        %850 = vmatprep.subr.mxu0 0.0
        %851 = vmatpush2.msra.mxu0 0.0
        %852 = vmatprep.subr.mxu0 0.0
        %853 = vmatpush2.msra.mxu0 0.0
        %854 = vmatprep.subr.mxu0 0.0
        %855 = vmatpush2.msra.mxu0 0.0
        %856 = vmatprep.subr.mxu0 0.0
        %857 = vmatpush2.msra.mxu0 0.0
        %858 = vmatprep.subr.mxu0 0.0
        %859 = vmatpush2.msra.mxu0 0.0
        %860 = vmatprep.subr.mxu0 0.0
        %861 = vmatpush2.msra.mxu0 0.0
        %862 = vmatprep.subr.mxu0 0.0
        %863 = vmatpush2.msra.mxu0 0.0
        %864 = vmatprep.subr.mxu0 0.0
        %865 = vmatpush2.msra.mxu0 0.0
        %866 = vmatprep.subr.mxu0 0.0
        %867 = vmatpush2.msra.mxu0 0.0
        %868 = vmatprep.subr.mxu0 0.0
        %869 = vmatpush2.msra.mxu0 0.0
        %870 = vmatprep.subr.mxu0 0.0
        %871 = vmatpush2.msra.mxu0 0.0
        %872 = vmatprep.subr.mxu0 0.0
        %873 = vmatpush2.msra.mxu0 0.0
        %874 = vmatprep.mubr.f32.mxu0 0.0
        %875 = vmatmul.mubr.f32.gmra.mxu0 %v805
        %v876 = vpop.f32.mrf.mxu0
        %v877 = vadd.f32 0.0, %v876
        %v878 = vpop.f32.mrf.mxu0
        %879 = vmatprep.mubr.f32.mxu0 0.0
        %880 = vmatmul.mubr.f32.gmra.mxu0 %v808
        %v881 = vpop.f32.mrf.mxu0
        %v882 = vadd.f32 0.0, %v881
        %v883 = vpop.f32.mrf.mxu0
        %884 = vdwg.mxu0
        %v885 = vadd.f32 %v785, %v877
        %v886 = vadd.f32 %v790, %v882
        %v887 = vld [vmem:[#allocation3 + $0x1] sm:$0xff]
        %v888 = vld [vmem:[#allocation3 + $0x9] sm:$0xff]
        %s889 = scalar_lea.vmem [#allocation11], 64
        %v890 = vld [vmem:[%s889] sm:$0xff]
        %v891 = vld [vmem:[%s889 + $0x8] sm:$0xff]
        %v892 = vld [vmem:[%s889 + $0x10] sm:$0xff]
        %v893 = vld [vmem:[%s889 + $0x18] sm:$0xff]
        %v894 = vld [vmem:[%s889 + $0x20] sm:$0xff]
        %v895 = vld [vmem:[%s889 + $0x28] sm:$0xff]
        %v896 = vld [vmem:[%s889 + $0x30] sm:$0xff]
        %v897 = vld [vmem:[%s889 + $0x38] sm:$0xff]
        %v899 = vsel %vm597, %v887, 0
        %v902 = vsel %vm597, %v888, 0
        %904 = vmatprep.subr.mxu0 0.0
        %905 = vmatpush1.msra.mxu0 0.0
        %906 = vmatprep.subr.mxu0 0.0
        %907 = vmatpush1.msra.mxu0 0.0
        %908 = vmatprep.subr.mxu0 0.0
        %909 = vmatpush1.msra.mxu0 0.0
        %910 = vmatprep.subr.mxu0 0.0
        %911 = vmatpush1.msra.mxu0 0.0
        %912 = vmatprep.subr.mxu0 0.0
        %913 = vmatpush1.msra.mxu0 0.0
        %914 = vmatprep.subr.mxu0 0.0
        %915 = vmatpush1.msra.mxu0 0.0
        %916 = vmatprep.subr.mxu0 0.0
        %917 = vmatpush1.msra.mxu0 0.0
        %918 = vmatprep.subr.mxu0 0.0
        %919 = vmatpush1.msra.mxu0 0.0
        %920 = vmatprep.subr.mxu0 0.0
        %921 = vmatpush1.msra.mxu0 %v897
        %922 = vmatprep.subr.mxu0 0.0
        %923 = vmatpush1.msra.mxu0 %v896
        %924 = vmatprep.subr.mxu0 0.0
        %925 = vmatpush1.msra.mxu0 %v895
        %926 = vmatprep.subr.mxu0 0.0
        %927 = vmatpush1.msra.mxu0 %v894
        %928 = vmatprep.subr.mxu0 0.0
        %929 = vmatpush1.msra.mxu0 %v893
        %930 = vmatprep.subr.mxu0 0.0
        %931 = vmatpush1.msra.mxu0 %v892
        %932 = vmatprep.subr.mxu0 0.0
        %933 = vmatpush1.msra.mxu0 %v891
        %934 = vmatprep.subr.mxu0 0.0
        %935 = vmatpush1.msra.mxu0 %v890
        %936 = vmatprep.subr.mxu0 0.0
        %937 = vmatpush2.msra.mxu0 0.0
        %938 = vmatprep.subr.mxu0 0.0
        %939 = vmatpush2.msra.mxu0 0.0
        %940 = vmatprep.subr.mxu0 0.0
        %941 = vmatpush2.msra.mxu0 0.0
        %942 = vmatprep.subr.mxu0 0.0
        %943 = vmatpush2.msra.mxu0 0.0
        %944 = vmatprep.subr.mxu0 0.0
        %945 = vmatpush2.msra.mxu0 0.0
        %946 = vmatprep.subr.mxu0 0.0
        %947 = vmatpush2.msra.mxu0 0.0
        %948 = vmatprep.subr.mxu0 0.0
        %949 = vmatpush2.msra.mxu0 0.0
        %950 = vmatprep.subr.mxu0 0.0
        %951 = vmatpush2.msra.mxu0 0.0
        %952 = vmatprep.subr.mxu0 0.0
        %953 = vmatpush2.msra.mxu0 0.0
        %954 = vmatprep.subr.mxu0 0.0
        %955 = vmatpush2.msra.mxu0 0.0
        %956 = vmatprep.subr.mxu0 0.0
        %957 = vmatpush2.msra.mxu0 0.0
        %958 = vmatprep.subr.mxu0 0.0
        %959 = vmatpush2.msra.mxu0 0.0
        %960 = vmatprep.subr.mxu0 0.0
        %961 = vmatpush2.msra.mxu0 0.0
        %962 = vmatprep.subr.mxu0 0.0
        %963 = vmatpush2.msra.mxu0 0.0
        %964 = vmatprep.subr.mxu0 0.0
        %965 = vmatpush2.msra.mxu0 0.0
        %966 = vmatprep.subr.mxu0 0.0
        %967 = vmatpush2.msra.mxu0 0.0
        %968 = vmatprep.mubr.f32.mxu0 0.0
        %969 = vmatmul.mubr.f32.gmra.mxu0 %v899
        %v970 = vpop.f32.mrf.mxu0
        %v971 = vadd.f32 0.0, %v970
        %v972 = vpop.f32.mrf.mxu0
        %973 = vmatprep.mubr.f32.mxu0 0.0
        %974 = vmatmul.mubr.f32.gmra.mxu0 %v902
        %v975 = vpop.f32.mrf.mxu0
        %v976 = vadd.f32 0.0, %v975
        %v977 = vpop.f32.mrf.mxu0
        %978 = vdwg.mxu0
        %v979 = vadd.f32 %v885, %v971
        %v980 = vadd.f32 %v886, %v976
        %v981 = vld [vmem:[#allocation2 + $0x2] sm:$0xff]
        %v982 = vld [vmem:[#allocation2 + $0xa] sm:$0xff]
        %s983 = scalar_lea.vmem [#allocation10], 128
        %v984 = vld [vmem:[%s983] sm:$0xff]
        %v985 = vld [vmem:[%s983 + $0x8] sm:$0xff]
        %v986 = vld [vmem:[%s983 + $0x10] sm:$0xff]
        %v987 = vld [vmem:[%s983 + $0x18] sm:$0xff]
        %v988 = vld [vmem:[%s983 + $0x20] sm:$0xff]
        %v989 = vld [vmem:[%s983 + $0x28] sm:$0xff]
        %v990 = vld [vmem:[%s983 + $0x30] sm:$0xff]
        %v991 = vld [vmem:[%s983 + $0x38] sm:$0xff]
        %v993 = vsel %vm597, %v981, 0
        %v996 = vsel %vm597, %v982, 0
        %998 = vmatprep.subr.mxu0 0.0
        %999 = vmatpush1.msra.mxu0 0.0
        %1000 = vmatprep.subr.mxu0 0.0
        %1001 = vmatpush1.msra.mxu0 0.0
        %1002 = vmatprep.subr.mxu0 0.0
        %1003 = vmatpush1.msra.mxu0 0.0
        %1004 = vmatprep.subr.mxu0 0.0
        %1005 = vmatpush1.msra.mxu0 0.0
        %1006 = vmatprep.subr.mxu0 0.0
        %1007 = vmatpush1.msra.mxu0 0.0
        %1008 = vmatprep.subr.mxu0 0.0
        %1009 = vmatpush1.msra.mxu0 0.0
        %1010 = vmatprep.subr.mxu0 0.0
        %1011 = vmatpush1.msra.mxu0 0.0
        %1012 = vmatprep.subr.mxu0 0.0
        %1013 = vmatpush1.msra.mxu0 0.0
        %1014 = vmatprep.subr.mxu0 0.0
        %1015 = vmatpush1.msra.mxu0 %v991
        %1016 = vmatprep.subr.mxu0 0.0
        %1017 = vmatpush1.msra.mxu0 %v990
        %1018 = vmatprep.subr.mxu0 0.0
        %1019 = vmatpush1.msra.mxu0 %v989
        %1020 = vmatprep.subr.mxu0 0.0
        %1021 = vmatpush1.msra.mxu0 %v988
        %1022 = vmatprep.subr.mxu0 0.0
        %1023 = vmatpush1.msra.mxu0 %v987
        %1024 = vmatprep.subr.mxu0 0.0
        %1025 = vmatpush1.msra.mxu0 %v986
        %1026 = vmatprep.subr.mxu0 0.0
        %1027 = vmatpush1.msra.mxu0 %v985
        %1028 = vmatprep.subr.mxu0 0.0
        %1029 = vmatpush1.msra.mxu0 %v984
        %1030 = vmatprep.subr.mxu0 0.0
        %1031 = vmatpush2.msra.mxu0 0.0
        %1032 = vmatprep.subr.mxu0 0.0
        %1033 = vmatpush2.msra.mxu0 0.0
        %1034 = vmatprep.subr.mxu0 0.0
        %1035 = vmatpush2.msra.mxu0 0.0
        %1036 = vmatprep.subr.mxu0 0.0
        %1037 = vmatpush2.msra.mxu0 0.0
        %1038 = vmatprep.subr.mxu0 0.0
        %1039 = vmatpush2.msra.mxu0 0.0
        %1040 = vmatprep.subr.mxu0 0.0
        %1041 = vmatpush2.msra.mxu0 0.0
        %1042 = vmatprep.subr.mxu0 0.0
        %1043 = vmatpush2.msra.mxu0 0.0
        %1044 = vmatprep.subr.mxu0 0.0
        %1045 = vmatpush2.msra.mxu0 0.0
        %1046 = vmatprep.subr.mxu0 0.0
        %1047 = vmatpush2.msra.mxu0 0.0
        %1048 = vmatprep.subr.mxu0 0.0
        %1049 = vmatpush2.msra.mxu0 0.0
        %1050 = vmatprep.subr.mxu0 0.0
        %1051 = vmatpush2.msra.mxu0 0.0
        %1052 = vmatprep.subr.mxu0 0.0
        %1053 = vmatpush2.msra.mxu0 0.0
        %1054 = vmatprep.subr.mxu0 0.0
        %1055 = vmatpush2.msra.mxu0 0.0
        %1056 = vmatprep.subr.mxu0 0.0
        %1057 = vmatpush2.msra.mxu0 0.0
        %1058 = vmatprep.subr.mxu0 0.0
        %1059 = vmatpush2.msra.mxu0 0.0
        %1060 = vmatprep.subr.mxu0 0.0
        %1061 = vmatpush2.msra.mxu0 0.0
        %1062 = vmatprep.mubr.f32.mxu0 0.0
        %1063 = vmatmul.mubr.f32.gmra.mxu0 %v993
        %v1064 = vpop.f32.mrf.mxu0
        %v1065 = vadd.f32 0.0, %v1064
        %v1066 = vpop.f32.mrf.mxu0
        %1067 = vmatprep.mubr.f32.mxu0 0.0
        %1068 = vmatmul.mubr.f32.gmra.mxu0 %v996
        %v1069 = vpop.f32.mrf.mxu0
        %v1070 = vadd.f32 0.0, %v1069
        %v1071 = vpop.f32.mrf.mxu0
        %1072 = vdwg.mxu0
        %v1073 = vadd.f32 %v979, %v1065
        %v1074 = vadd.f32 %v980, %v1070
        %v1075 = vld [vmem:[#allocation3 + $0x2] sm:$0xff]
        %v1076 = vld [vmem:[#allocation3 + $0xa] sm:$0xff]
        %s1077 = scalar_lea.vmem [#allocation11], 128
        %v1078 = vld [vmem:[%s1077] sm:$0xff]
        %v1079 = vld [vmem:[%s1077 + $0x8] sm:$0xff]
        %v1080 = vld [vmem:[%s1077 + $0x10] sm:$0xff]
        %v1081 = vld [vmem:[%s1077 + $0x18] sm:$0xff]
        %v1082 = vld [vmem:[%s1077 + $0x20] sm:$0xff]
        %v1083 = vld [vmem:[%s1077 + $0x28] sm:$0xff]
        %v1084 = vld [vmem:[%s1077 + $0x30] sm:$0xff]
        %v1085 = vld [vmem:[%s1077 + $0x38] sm:$0xff]
        %v1087 = vsel %vm597, %v1075, 0
        %v1090 = vsel %vm597, %v1076, 0
        %1092 = vmatprep.subr.mxu0 0.0
        %1093 = vmatpush1.msra.mxu0 0.0
        %1094 = vmatprep.subr.mxu0 0.0
        %1095 = vmatpush1.msra.mxu0 0.0
        %1096 = vmatprep.subr.mxu0 0.0
        %1097 = vmatpush1.msra.mxu0 0.0
        %1098 = vmatprep.subr.mxu0 0.0
        %1099 = vmatpush1.msra.mxu0 0.0
        %1100 = vmatprep.subr.mxu0 0.0
        %1101 = vmatpush1.msra.mxu0 0.0
        %1102 = vmatprep.subr.mxu0 0.0
        %1103 = vmatpush1.msra.mxu0 0.0
        %1104 = vmatprep.subr.mxu0 0.0
        %1105 = vmatpush1.msra.mxu0 0.0
        %1106 = vmatprep.subr.mxu0 0.0
        %1107 = vmatpush1.msra.mxu0 0.0
        %1108 = vmatprep.subr.mxu0 0.0
        %1109 = vmatpush1.msra.mxu0 %v1085
        %1110 = vmatprep.subr.mxu0 0.0
        %1111 = vmatpush1.msra.mxu0 %v1084
        %1112 = vmatprep.subr.mxu0 0.0
        %1113 = vmatpush1.msra.mxu0 %v1083
        %1114 = vmatprep.subr.mxu0 0.0
        %1115 = vmatpush1.msra.mxu0 %v1082
        %1116 = vmatprep.subr.mxu0 0.0
        %1117 = vmatpush1.msra.mxu0 %v1081
        %1118 = vmatprep.subr.mxu0 0.0
        %1119 = vmatpush1.msra.mxu0 %v1080
        %1120 = vmatprep.subr.mxu0 0.0
        %1121 = vmatpush1.msra.mxu0 %v1079
        %1122 = vmatprep.subr.mxu0 0.0
        %1123 = vmatpush1.msra.mxu0 %v1078
        %1124 = vmatprep.subr.mxu0 0.0
        %1125 = vmatpush2.msra.mxu0 0.0
        %1126 = vmatprep.subr.mxu0 0.0
        %1127 = vmatpush2.msra.mxu0 0.0
        %1128 = vmatprep.subr.mxu0 0.0
        %1129 = vmatpush2.msra.mxu0 0.0
        %1130 = vmatprep.subr.mxu0 0.0
        %1131 = vmatpush2.msra.mxu0 0.0
        %1132 = vmatprep.subr.mxu0 0.0
        %1133 = vmatpush2.msra.mxu0 0.0
        %1134 = vmatprep.subr.mxu0 0.0
        %1135 = vmatpush2.msra.mxu0 0.0
        %1136 = vmatprep.subr.mxu0 0.0
        %1137 = vmatpush2.msra.mxu0 0.0
        %1138 = vmatprep.subr.mxu0 0.0
        %1139 = vmatpush2.msra.mxu0 0.0
        %1140 = vmatprep.subr.mxu0 0.0
        %1141 = vmatpush2.msra.mxu0 0.0
        %1142 = vmatprep.subr.mxu0 0.0
        %1143 = vmatpush2.msra.mxu0 0.0
        %1144 = vmatprep.subr.mxu0 0.0
        %1145 = vmatpush2.msra.mxu0 0.0
        %1146 = vmatprep.subr.mxu0 0.0
        %1147 = vmatpush2.msra.mxu0 0.0
        %1148 = vmatprep.subr.mxu0 0.0
        %1149 = vmatpush2.msra.mxu0 0.0
        %1150 = vmatprep.subr.mxu0 0.0
        %1151 = vmatpush2.msra.mxu0 0.0
        %1152 = vmatprep.subr.mxu0 0.0
        %1153 = vmatpush2.msra.mxu0 0.0
        %1154 = vmatprep.subr.mxu0 0.0
        %1155 = vmatpush2.msra.mxu0 0.0
        %1156 = vmatprep.mubr.f32.mxu0 0.0
        %1157 = vmatmul.mubr.f32.gmra.mxu0 %v1087
        %v1158 = vpop.f32.mrf.mxu0
        %v1159 = vadd.f32 0.0, %v1158
        %v1160 = vpop.f32.mrf.mxu0
        %1161 = vmatprep.mubr.f32.mxu0 0.0
        %1162 = vmatmul.mubr.f32.gmra.mxu0 %v1090
        %v1163 = vpop.f32.mrf.mxu0
        %v1164 = vadd.f32 0.0, %v1163
        %v1165 = vpop.f32.mrf.mxu0
        %1166 = vdwg.mxu0
        %v1167 = vadd.f32 %v1073, %v1159
        %v1168 = vadd.f32 %v1074, %v1164
        %v1169 = vld [vmem:[%s7] sm:$0x1]
        %v1171 = vlaneseq
        %v1172 = vshrl.u32 %v1171, 7
        %v1173 = vsub.s32 0, %v1172
        %v1174 = vrot.slane %v1169, %v1173
        %v1176 = vadd.f32 %v1167, %v1174
        %v1177 = vadd.f32 %v1168, %v1174
        %v1178 = vmax.f32 %v1176, 0.0
        %v1179 = vmax.f32 %v1177, 0.0
        %1180 = vst.msk [vmem:[#allocation4] sm:$0xff] %vm597, 0.0
        %1181 = vst.msk [vmem:[#allocation4 + $0x8] sm:$0xff] %vm597, 0.0
        %1182 = vst.msk [vmem:[#allocation4 + $0x10] sm:$0x3] %vm600, 0.0
        %1183 = vst.msk [vmem:[#allocation4 + $0x1] sm:$0xff] %vm597, %v1178
        %1184 = vst.msk [vmem:[#allocation4 + $0x9] sm:$0xff] %vm597, %v1179
        %v1185 = vld [vmem:[#allocation4] sm:$0xff]
        %v1186 = vld [vmem:[#allocation4 + $0x8] sm:$0xff]
        %v1187 = vld [vmem:[#allocation13] sm:$0xff]
        %v1188 = vld [vmem:[#allocation13 + $0x8] sm:$0xff]
        %v1189 = vld [vmem:[#allocation13 + $0x10] sm:$0xff]
        %v1190 = vld [vmem:[#allocation13 + $0x18] sm:$0xff]
        %v1191 = vld [vmem:[#allocation13 + $0x20] sm:$0xff]
        %v1192 = vld [vmem:[#allocation13 + $0x28] sm:$0xff]
        %v1193 = vld [vmem:[#allocation13 + $0x30] sm:$0xff]
        %v1194 = vld [vmem:[#allocation13 + $0x38] sm:$0xff]
        %v1195 = vld [vmem:[#allocation4 + $0x1] sm:$0xff]
        %v1196 = vld [vmem:[#allocation4 + $0x9] sm:$0xff]
        %s1197 = scalar_lea.vmem [#allocation13], 64
        %v1198 = vld [vmem:[%s1197] sm:$0xff]
        %v1199 = vld [vmem:[%s1197 + $0x8] sm:$0xff]
        %v1200 = vld [vmem:[%s1197 + $0x10] sm:$0xff]
        %v1201 = vld [vmem:[%s1197 + $0x18] sm:$0xff]
        %v1202 = vld [vmem:[%s1197 + $0x20] sm:$0xff]
        %v1203 = vld [vmem:[%s1197 + $0x28] sm:$0xff]
        %v1204 = vld [vmem:[%s1197 + $0x30] sm:$0xff]
        %v1205 = vld [vmem:[%s1197 + $0x38] sm:$0xff]
        %v1207 = vsel %vm597, %v1195, 0
        %v1210 = vsel %vm597, %v1196, 0
        %1212 = vmatprep.subr.mxu0 0.0
        %1213 = vmatpush1.msra.mxu0 0.0
        %1214 = vmatprep.subr.mxu0 0.0
        %1215 = vmatpush1.msra.mxu0 0.0
        %1216 = vmatprep.subr.mxu0 0.0
        %1217 = vmatpush1.msra.mxu0 0.0
        %1218 = vmatprep.subr.mxu0 0.0
        %1219 = vmatpush1.msra.mxu0 0.0
        %1220 = vmatprep.subr.mxu0 0.0
        %1221 = vmatpush1.msra.mxu0 0.0
        %1222 = vmatprep.subr.mxu0 0.0
        %1223 = vmatpush1.msra.mxu0 0.0
        %1224 = vmatprep.subr.mxu0 0.0
        %1225 = vmatpush1.msra.mxu0 0.0
        %1226 = vmatprep.subr.mxu0 0.0
        %1227 = vmatpush1.msra.mxu0 0.0
        %1228 = vmatprep.subr.mxu0 0.0
        %1229 = vmatpush1.msra.mxu0 %v1205
        %1230 = vmatprep.subr.mxu0 0.0
        %1231 = vmatpush1.msra.mxu0 %v1204
        %1232 = vmatprep.subr.mxu0 0.0
        %1233 = vmatpush1.msra.mxu0 %v1203
        %1234 = vmatprep.subr.mxu0 0.0
        %1235 = vmatpush1.msra.mxu0 %v1202
        %1236 = vmatprep.subr.mxu0 0.0
        %1237 = vmatpush1.msra.mxu0 %v1201
        %1238 = vmatprep.subr.mxu0 0.0
        %1239 = vmatpush1.msra.mxu0 %v1200
        %1240 = vmatprep.subr.mxu0 0.0
        %1241 = vmatpush1.msra.mxu0 %v1199
        %1242 = vmatprep.subr.mxu0 0.0
        %1243 = vmatpush1.msra.mxu0 %v1198
        %1244 = vmatprep.subr.mxu0 0.0
        %1245 = vmatpush2.msra.mxu0 0.0
        %1246 = vmatprep.subr.mxu0 0.0
        %1247 = vmatpush2.msra.mxu0 0.0
        %1248 = vmatprep.subr.mxu0 0.0
        %1249 = vmatpush2.msra.mxu0 0.0
        %1250 = vmatprep.subr.mxu0 0.0
        %1251 = vmatpush2.msra.mxu0 0.0
        %1252 = vmatprep.subr.mxu0 0.0
        %1253 = vmatpush2.msra.mxu0 0.0
        %1254 = vmatprep.subr.mxu0 0.0
        %1255 = vmatpush2.msra.mxu0 0.0
        %1256 = vmatprep.subr.mxu0 0.0
        %1257 = vmatpush2.msra.mxu0 0.0
        %1258 = vmatprep.subr.mxu0 0.0
        %1259 = vmatpush2.msra.mxu0 0.0
        %1260 = vmatprep.subr.mxu0 0.0
        %1261 = vmatpush2.msra.mxu0 0.0
        %1262 = vmatprep.subr.mxu0 0.0
        %1263 = vmatpush2.msra.mxu0 0.0
        %1264 = vmatprep.subr.mxu0 0.0
        %1265 = vmatpush2.msra.mxu0 0.0
        %1266 = vmatprep.subr.mxu0 0.0
        %1267 = vmatpush2.msra.mxu0 0.0
        %1268 = vmatprep.subr.mxu0 0.0
        %1269 = vmatpush2.msra.mxu0 0.0
        %1270 = vmatprep.subr.mxu0 0.0
        %1271 = vmatpush2.msra.mxu0 0.0
        %1272 = vmatprep.subr.mxu0 0.0
        %1273 = vmatpush2.msra.mxu0 0.0
        %1274 = vmatprep.subr.mxu0 0.0
        %1275 = vmatpush2.msra.mxu0 0.0
        %1276 = vmatprep.mubr.f32.mxu0 0.0
        %1277 = vmatmul.mubr.f32.gmra.mxu0 %v1207
        %v1278 = vpop.f32.mrf.mxu0
        %v1279 = vadd.f32 0.0, %v1278
        %v1280 = vpop.f32.mrf.mxu0
        %1281 = vmatprep.mubr.f32.mxu0 0.0
        %1282 = vmatmul.mubr.f32.gmra.mxu0 %v1210
        %v1283 = vpop.f32.mrf.mxu0
        %v1284 = vadd.f32 0.0, %v1283
        %v1285 = vpop.f32.mrf.mxu0
        %1286 = vdwg.mxu0
        %v1288 = vsel %vm597, %v1185, 0
        %v1291 = vsel %vm597, %v1186, 0
        %1293 = vmatprep.subr.mxu0 0.0
        %1294 = vmatpush1.msra.mxu0 0.0
        %1295 = vmatprep.subr.mxu0 0.0
        %1296 = vmatpush1.msra.mxu0 0.0
        %1297 = vmatprep.subr.mxu0 0.0
        %1298 = vmatpush1.msra.mxu0 0.0
        %1299 = vmatprep.subr.mxu0 0.0
        %1300 = vmatpush1.msra.mxu0 0.0
        %1301 = vmatprep.subr.mxu0 0.0
        %1302 = vmatpush1.msra.mxu0 0.0
        %1303 = vmatprep.subr.mxu0 0.0
        %1304 = vmatpush1.msra.mxu0 0.0
        %1305 = vmatprep.subr.mxu0 0.0
        %1306 = vmatpush1.msra.mxu0 0.0
        %1307 = vmatprep.subr.mxu0 0.0
        %1308 = vmatpush1.msra.mxu0 0.0
        %1309 = vmatprep.subr.mxu0 0.0
        %1310 = vmatpush1.msra.mxu0 %v1194
        %1311 = vmatprep.subr.mxu0 0.0
        %1312 = vmatpush1.msra.mxu0 %v1193
        %1313 = vmatprep.subr.mxu0 0.0
        %1314 = vmatpush1.msra.mxu0 %v1192
        %1315 = vmatprep.subr.mxu0 0.0
        %1316 = vmatpush1.msra.mxu0 %v1191
        %1317 = vmatprep.subr.mxu0 0.0
        %1318 = vmatpush1.msra.mxu0 %v1190
        %1319 = vmatprep.subr.mxu0 0.0
        %1320 = vmatpush1.msra.mxu0 %v1189
        %1321 = vmatprep.subr.mxu0 0.0
        %1322 = vmatpush1.msra.mxu0 %v1188
        %1323 = vmatprep.subr.mxu0 0.0
        %1324 = vmatpush1.msra.mxu0 %v1187
        %1325 = vmatprep.subr.mxu0 0.0
        %1326 = vmatpush2.msra.mxu0 0.0
        %1327 = vmatprep.subr.mxu0 0.0
        %1328 = vmatpush2.msra.mxu0 0.0
        %1329 = vmatprep.subr.mxu0 0.0
        %1330 = vmatpush2.msra.mxu0 0.0
        %1331 = vmatprep.subr.mxu0 0.0
        %1332 = vmatpush2.msra.mxu0 0.0
        %1333 = vmatprep.subr.mxu0 0.0
        %1334 = vmatpush2.msra.mxu0 0.0
        %1335 = vmatprep.subr.mxu0 0.0
        %1336 = vmatpush2.msra.mxu0 0.0
        %1337 = vmatprep.subr.mxu0 0.0
        %1338 = vmatpush2.msra.mxu0 0.0
        %1339 = vmatprep.subr.mxu0 0.0
        %1340 = vmatpush2.msra.mxu0 0.0
        %1341 = vmatprep.subr.mxu0 0.0
        %1342 = vmatpush2.msra.mxu0 0.0
        %1343 = vmatprep.subr.mxu0 0.0
        %1344 = vmatpush2.msra.mxu0 0.0
        %1345 = vmatprep.subr.mxu0 0.0
        %1346 = vmatpush2.msra.mxu0 0.0
        %1347 = vmatprep.subr.mxu0 0.0
        %1348 = vmatpush2.msra.mxu0 0.0
        %1349 = vmatprep.subr.mxu0 0.0
        %1350 = vmatpush2.msra.mxu0 0.0
        %1351 = vmatprep.subr.mxu0 0.0
        %1352 = vmatpush2.msra.mxu0 0.0
        %1353 = vmatprep.subr.mxu0 0.0
        %1354 = vmatpush2.msra.mxu0 0.0
        %1355 = vmatprep.subr.mxu0 0.0
        %1356 = vmatpush2.msra.mxu0 0.0
        %1357 = vmatprep.mubr.f32.mxu0 0.0
        %1358 = vmatmul.mubr.f32.gmra.mxu0 %v1288
        %v1359 = vpop.f32.mrf.mxu0
        %v1360 = vadd.f32 %v1279, %v1359
        %v1361 = vpop.f32.mrf.mxu0
        %1362 = vmatprep.mubr.f32.mxu0 0.0
        %1363 = vmatmul.mubr.f32.gmra.mxu0 %v1291
        %v1364 = vpop.f32.mrf.mxu0
        %v1365 = vadd.f32 %v1284, %v1364
        %v1366 = vpop.f32.mrf.mxu0
        %1367 = vdwg.mxu0
        %v1368 = vld [vmem:[#allocation4 + $0x2] sm:$0xff]
        %v1369 = vld [vmem:[#allocation4 + $0xa] sm:$0xff]
        %s1370 = scalar_lea.vmem [#allocation13], 128
        %v1371 = vld [vmem:[%s1370] sm:$0xff]
        %v1372 = vld [vmem:[%s1370 + $0x8] sm:$0xff]
        %v1373 = vld [vmem:[%s1370 + $0x10] sm:$0xff]
        %v1374 = vld [vmem:[%s1370 + $0x18] sm:$0xff]
        %v1375 = vld [vmem:[%s1370 + $0x20] sm:$0xff]
        %v1376 = vld [vmem:[%s1370 + $0x28] sm:$0xff]
        %v1377 = vld [vmem:[%s1370 + $0x30] sm:$0xff]
        %v1378 = vld [vmem:[%s1370 + $0x38] sm:$0xff]
        %v1380 = vsel %vm597, %v1368, 0
        %v1383 = vsel %vm597, %v1369, 0
        %1385 = vmatprep.subr.mxu0 0.0
        %1386 = vmatpush1.msra.mxu0 0.0
        %1387 = vmatprep.subr.mxu0 0.0
        %1388 = vmatpush1.msra.mxu0 0.0
        %1389 = vmatprep.subr.mxu0 0.0
        %1390 = vmatpush1.msra.mxu0 0.0
        %1391 = vmatprep.subr.mxu0 0.0
        %1392 = vmatpush1.msra.mxu0 0.0
        %1393 = vmatprep.subr.mxu0 0.0
        %1394 = vmatpush1.msra.mxu0 0.0
        %1395 = vmatprep.subr.mxu0 0.0
        %1396 = vmatpush1.msra.mxu0 0.0
        %1397 = vmatprep.subr.mxu0 0.0
        %1398 = vmatpush1.msra.mxu0 0.0
        %1399 = vmatprep.subr.mxu0 0.0
        %1400 = vmatpush1.msra.mxu0 0.0
        %1401 = vmatprep.subr.mxu0 0.0
        %1402 = vmatpush1.msra.mxu0 %v1378
        %1403 = vmatprep.subr.mxu0 0.0
        %1404 = vmatpush1.msra.mxu0 %v1377
        %1405 = vmatprep.subr.mxu0 0.0
        %1406 = vmatpush1.msra.mxu0 %v1376
        %1407 = vmatprep.subr.mxu0 0.0
        %1408 = vmatpush1.msra.mxu0 %v1375
        %1409 = vmatprep.subr.mxu0 0.0
        %1410 = vmatpush1.msra.mxu0 %v1374
        %1411 = vmatprep.subr.mxu0 0.0
        %1412 = vmatpush1.msra.mxu0 %v1373
        %1413 = vmatprep.subr.mxu0 0.0
        %1414 = vmatpush1.msra.mxu0 %v1372
        %1415 = vmatprep.subr.mxu0 0.0
        %1416 = vmatpush1.msra.mxu0 %v1371
        %1417 = vmatprep.subr.mxu0 0.0
        %1418 = vmatpush2.msra.mxu0 0.0
        %1419 = vmatprep.subr.mxu0 0.0
        %1420 = vmatpush2.msra.mxu0 0.0
        %1421 = vmatprep.subr.mxu0 0.0
        %1422 = vmatpush2.msra.mxu0 0.0
        %1423 = vmatprep.subr.mxu0 0.0
        %1424 = vmatpush2.msra.mxu0 0.0
        %1425 = vmatprep.subr.mxu0 0.0
        %1426 = vmatpush2.msra.mxu0 0.0
        %1427 = vmatprep.subr.mxu0 0.0
        %1428 = vmatpush2.msra.mxu0 0.0
        %1429 = vmatprep.subr.mxu0 0.0
        %1430 = vmatpush2.msra.mxu0 0.0
        %1431 = vmatprep.subr.mxu0 0.0
        %1432 = vmatpush2.msra.mxu0 0.0
        %1433 = vmatprep.subr.mxu0 0.0
        %1434 = vmatpush2.msra.mxu0 0.0
        %1435 = vmatprep.subr.mxu0 0.0
        %1436 = vmatpush2.msra.mxu0 0.0
        %1437 = vmatprep.subr.mxu0 0.0
        %1438 = vmatpush2.msra.mxu0 0.0
        %1439 = vmatprep.subr.mxu0 0.0
        %1440 = vmatpush2.msra.mxu0 0.0
        %1441 = vmatprep.subr.mxu0 0.0
        %1442 = vmatpush2.msra.mxu0 0.0
        %1443 = vmatprep.subr.mxu0 0.0
        %1444 = vmatpush2.msra.mxu0 0.0
        %1445 = vmatprep.subr.mxu0 0.0
        %1446 = vmatpush2.msra.mxu0 0.0
        %1447 = vmatprep.subr.mxu0 0.0
        %1448 = vmatpush2.msra.mxu0 0.0
        %1449 = vmatprep.mubr.f32.mxu0 0.0
        %1450 = vmatmul.mubr.f32.gmra.mxu0 %v1380
        %v1451 = vpop.f32.mrf.mxu0
        %v1452 = vadd.f32 0.0, %v1451
        %v1453 = vpop.f32.mrf.mxu0
        %1454 = vmatprep.mubr.f32.mxu0 0.0
        %1455 = vmatmul.mubr.f32.gmra.mxu0 %v1383
        %v1456 = vpop.f32.mrf.mxu0
        %v1457 = vadd.f32 0.0, %v1456
        %v1458 = vpop.f32.mrf.mxu0
        %1459 = vdwg.mxu0
        %v1460 = vadd.f32 %v1360, %v1452
        %v1461 = vadd.f32 %v1365, %v1457
        %v1462 = vld [vmem:[%s8] sm:$0x1]
        %v1464 = vlaneseq
        %v1465 = vshrl.u32 %v1464, 7
        %v1466 = vsub.s32 0, %v1465
        %v1467 = vrot.slane %v1462, %v1466
        %v1469 = vadd.f32 %v1460, %v1467
        %v1470 = vadd.f32 %v1461, %v1467
        %v1471 = vmax.f32 %v1469, 0.0
        %v1472 = vmax.f32 %v1470, 0.0
        %1473 = vst.msk [vmem:[%s421] sm:$0xff] %vm597, %v1471
        %1474 = vst.msk [vmem:[%s421 + $0x8] sm:$0xff] %vm597, %v1472
        %s1475 = sand.u32 %s235, 1
        %s1476 = scalar_lea.sflag [#allocation7], %s1475
        %s1477 = sand.u32 %s235, 1
        %s1478 = smul.addr %s1477, 16
        %s1479 = scalar_lea.vmem [#allocation14], %s1478
        // Predicated region
        $region77: #{tpu_custom_call.1} parent=55 // pred_check
          %p1480 = pneg %p245
        $region78: #{tpu_custom_call.1} parent=55 // pred_check_branch
          %1482 = sbr.rel (%p1480) target = $region80
        $region79: #{tpu_custom_call.1} parent=55 // pred_region
          %s1484 = ssub.s32 256, 256
          %1485 = vsyncadd %s1476, %s1484
          %s1486 = smul.addr %s28, 2
          %s1487 = smul.addr %s1486, 128
          %s1488 = scalar_lea.hbm %s9, %s1487
          %s1489 = sshll.u32 %s1479, 4
          %s1490 = int_to_ptr.vmem [resolvable:$true] %s1489
          %1495 = dma.vmem_to_hbm [thread:$0]  %s1490, 256, %s1488, %s1476, 128, 128, 8
        $region80: #{tpu_custom_call.1} parent=55 // pred_fallthru
          _
      $region56: #{tpu_custom_call.1} parent=5 // pred_fallthru
        _
      %p1496 = scmp.le.s32.totalorder 2, %s23
      // Predicated region
      $region81: #{tpu_custom_call.1} parent=5 // pred_check
        %p1497 = pneg %p1496
      $region82: #{tpu_custom_call.1} parent=5 // pred_check_branch
        %1499 = sbr.rel (%p1497) target = $region84
      $region83: #{tpu_custom_call.1} parent=5 // pred_region
        %s1500 = ssub.s32 %s23, 2
        // Predicated region
        $region85: #{tpu_custom_call.1} parent=83 // pred_check
          %p1501 = pneg %p251
        $region86: #{tpu_custom_call.1} parent=83 // pred_check_branch
          %1503 = sbr.rel (%p1501) target = $region88
        $region87: #{tpu_custom_call.1} parent=83 // pred_region
          %s1504 = sand.u32 %s236, 1
          %s1505 = scalar_lea.sflag [#allocation7], %s1504
          %s1506 = sand.u32 %s236, 1
          %s1507 = smul.addr %s1506, 16
          %s1508 = scalar_lea.vmem [#allocation14], %s1507
          %1509 = dma.done %s1505, 256
        $region88: #{tpu_custom_call.1} parent=83 // pred_fallthru
          _
      $region84: #{tpu_custom_call.1} parent=5 // pred_fallthru
        _
    $region6: #{tpu_custom_call.1} parent=1 // loop_footer
      %s27 = sadd.s32 1, %s23
    $region7: #{tpu_custom_call.1} parent=1 // loop_footer_branch
      %22 = sbr.rel target = $region3
    $region8: #{tpu_custom_call.1} parent=1 // loop_exit
      _
    %1510 = vsyncpa [#allocation6], 1
    %s1511 = scalar_lea.sflag [#allocation6], 1
    %1512 = vsyncpa %s1511, 1
    %1513 = vsyncpa [#allocation9], 1
    %1514 = vsyncpa [#allocation12], 1
    %1515 = vsyncpa [#allocation7], 1
    %s1516 = scalar_lea.sflag [#allocation7], 1
    %1517 = vsyncpa %s1516, 1

</llo_original>
